<compile_context>
chip_gen: v6e
topology: v6e:2x2x1
jax: 0.10.0
libtpu: 0.0.40
codegen_flags: <defaults>
</compile_context>

<pallas_src>
import functools

import jax
import jax.numpy as jnp
from jax import lax
from jax.experimental import pallas as pl
from jax.experimental.pallas import tpu as pltpu

NUM_CLASSES = 4
STRIDES = (8, 16, 32)
BOX_WEIGHT = 5.0
RADIUS = 2.5
BIG = 1e9
TA_CAP = 2048          # anchor lanes per tile (densified kernels keep vreg pressure low)


# ----------------------------------------------------------------------------- kernels


def _assign_cost_kernel(gt_ref, onehot_ref, raw_ref, anc_ref,
                        cost_ref, iou_ref, union_ref):
    f32 = jnp.float32
    raw = raw_ref[0].astype(f32)          # (5+C, TA)
    anc = anc_ref[...]                    # (8, TA): gx, gy, s, avalid, cx, cy, rs, 0
    s = anc[2:3, :]
    av = anc[3:4, :]
    cx = anc[4:5, :]
    cy = anc[5:6, :]
    rs = anc[6:7, :]

    # fused decode of the box head (dense 2-sublane slabs)
    pxy = (raw[0:2, :] + anc[0:2, :]) * s            # (2, TA)
    pwh = jnp.exp(raw[2:4, :]) * s                   # (2, TA)
    pmin = pxy - 0.5 * pwh
    pmax = pxy + 0.5 * pwh
    parea = pwh[0:1, :] * pwh[1:2, :]                # (1, TA)
    pconf = raw[4:5, :]
    pcls = raw[5:, :]

    # class-cost shared part: BCE(sqrt(sig(cls)*sig(conf)), onehot) summed over classes
    #   = -onehot . (logp - log1mp) - sum(log1mp)   -> dot term goes to the (idle) MXU
    p = jnp.sqrt(jax.nn.sigmoid(pcls) * jax.nn.sigmoid(pconf))
    p = jnp.clip(p, 1e-9, 1.0 - 1e-9)
    logp = jnp.log(p)
    log1mp = jnp.log1p(-p)
    sum_log1mp = jnp.sum(log1mp, axis=0, keepdims=True)                  # (1, TA)
    onehot = onehot_ref[0].astype(jnp.bfloat16)                          # (G, C)
    dotterm = jnp.dot(onehot, (logp - log1mp).astype(jnp.bfloat16),
                      preferred_element_type=f32)                        # (G, TA)

    # GT-side bounds: (G, 1) columns lane-broadcast against (1, TA) anchors -> dense (G, TA)
    gt = gt_ref[0]                        # (G, 8): gx, gy, bminx, bminy, bmaxx, bmaxy, area, valid
    gxc = gt[:, 0:1]
    gyc = gt[:, 1:2]
    bminx = gt[:, 2:3]
    bminy = gt[:, 3:4]
    bmaxx = gt[:, 4:5]
    bmaxy = gt[:, 5:6]
    garea = gt[:, 6:7]
    gvf = gt[:, 7:8]                      # 1.0 valid GT, 0.0 padded GT (padded boxes are
                                          # shifted far off-image in the wrapper)

    in_box = (cx > bminx) & (cy > bminy) & (cx < bmaxx) & (cy < bmaxy)   # (G, TA)
    in_mirror = (jnp.abs(cx - gxc) < rs) & (jnp.abs(cy - gyc) < rs)      # (G, TA)
    inter_mask = in_box & in_mirror
    union_f = jnp.max((in_box | in_mirror).astype(f32),
                      axis=0, keepdims=True) * av                        # (1, TA)

    iw = jnp.maximum(jnp.minimum(pmax[0:1, :], bmaxx) -
                     jnp.maximum(pmin[0:1, :], bminx), 0.0)
    ih = jnp.maximum(jnp.minimum(pmax[1:2, :], bmaxy) -
                     jnp.maximum(pmin[1:2, :], bminy), 0.0)
    inter_area = iw * ih                                                 # (G, TA)
    # exact divide: this IoU feeds dynamic-k and the soft class targets (reported loss)
    iou = inter_area / (garea + parea - inter_area + 1e-16)

    base = -dotterm - sum_log1mp - 3.0 * jnp.log(iou + 1e-8)
    cost = jnp.where(inter_mask, base, base + 1e5)       # not-in-intersection penalty
    cost = cost + BIG * (1.0 - gvf) + BIG * (1.0 - union_f)   # padded-GT / non-union penalty

    # single full-block store per output, no read-modify-write
    cost_ref[0] = cost
    iou_ref[0] = iou * gvf * union_f
    union_ref[0] = union_f


def _loss_kernel(raw_ref, anc_ref, tgt_box_ref, tgt_ct_ref, fg_ref, out_ref):
    f32 = jnp.float32

    @pl.when(pl.program_id(1) == 0)
    def _init():
        out_ref[...] = jnp.zeros_like(out_ref)

    raw = raw_ref[0].astype(f32)          # (5+C, TA)
    anc = anc_ref[...]                    # (8, TA)
    s = anc[2:3, :]
    av = anc[3:4, :]                      # 1.0 = real anchor, 0.0 = lane padding
    fg = fg_ref[0]                        # (1, TA)   final foreground mask
    tgt_ct = tgt_ct_ref[0]                # (1+C, TA) stacked [conf target; class targets]
    tb = tgt_box_ref[0]                   # (4, TA)

    # fused decode of the box head
    pxy = (raw[0:2, :] + anc[0:2, :]) * s
    pwh = jnp.exp(raw[2:4, :]) * s

    # objectness + class BCE computed on one stacked (1+C, TA) slab (dense sublanes)
    logits = raw[4:, :]                   # (1+C, TA)
    bce = (jnp.maximum(logits, 0.0) - logits * tgt_ct
           + jnp.log1p(jnp.exp(-jnp.abs(logits))))
    conf_s = jnp.sum(bce[0:1, :] * av, axis=1, keepdims=True)            # (1, 1)
    cls_s = jnp.sum(jnp.sum(bce[1:, :] * fg, axis=0, keepdims=True),
                    axis=1, keepdims=True)                               # (1, 1)

    txy = tb[0:2, :]
    twh = tb[2:4, :]
    ilo = jnp.maximum(pxy - 0.5 * pwh, txy - 0.5 * twh)
    ihi = jnp.minimum(pxy + 0.5 * pwh, txy + 0.5 * twh)
    wh = jnp.maximum(ihi - ilo, 0.0)
    inter = wh[0:1, :] * wh[1:2, :]
    iou = inter / (pwh[0:1, :] * pwh[1:2, :] + twh[0:1, :] * twh[1:2, :] - inter + 1e-16)
    # TODO(synk): the reference pulls iou_loss from yaml (`yaml_cfg['iou_loss']`); the
    #             standard YOLOX IOUloss(reduction='none') == 1 - iou**2 is used here.
    box_s = jnp.sum((1.0 - iou * iou) * fg, axis=1, keepdims=True)       # (1, 1)

    # accumulate a single lane-dense output row: [5*box, conf, cls, 0, ...]
    lane = lax.broadcasted_iota(jnp.int32, (1, 128), 1)
    partial = (jnp.where(lane == 0, BOX_WEIGHT * box_s, 0.0)
               + jnp.where(lane == 1, conf_s, 0.0)
               + jnp.where(lane == 2, cls_s, 0.0))
    out_ref[0] = out_ref[0] + partial


# ----------------------------------------------------------------------------- wrappers


def assign_cost(gtinfo, gt_onehot, raw, anc, *, ta):
    B, C5, A_pad = raw.shape
    G, C = gt_onehot.shape[1], gt_onehot.shape[2]
    n_a = A_pad // ta
    out_shapes = (jax.ShapeDtypeStruct((B, G, A_pad), jnp.float32),
                  jax.ShapeDtypeStruct((B, G, A_pad), jnp.float32),
                  jax.ShapeDtypeStruct((B, 1, A_pad), jnp.float32))
    return pl.pallas_call(
        _assign_cost_kernel,
        out_shape=out_shapes,
        grid=(B, n_a),
        in_specs=[pl.BlockSpec((1, G, 8), lambda b, a: (b, 0, 0)),   # GT bounds table
                  pl.BlockSpec((1, G, C), lambda b, a: (b, 0, 0)),   # GT one-hot
                  pl.BlockSpec((1, C5, ta), lambda b, a: (b, 0, a)), # raw head
                  pl.BlockSpec((8, ta), lambda b, a: (0, a))],       # packed anchor table
        out_specs=(pl.BlockSpec((1, G, ta), lambda b, a: (b, 0, a)),
                   pl.BlockSpec((1, G, ta), lambda b, a: (b, 0, a)),
                   pl.BlockSpec((1, 1, ta), lambda b, a: (b, 0, a))),
        compiler_params=pltpu.CompilerParams(
            dimension_semantics=("parallel", "parallel")),
    )(gtinfo, gt_onehot, raw, anc)


def loss_sums(raw, anc, tgt_box, tgt_ct, fg, *, ta):
    B, C5, A_pad = raw.shape
    C1 = tgt_ct.shape[1]
    n_a = A_pad // ta
    return pl.pallas_call(
        _loss_kernel,
        out_shape=jax.ShapeDtypeStruct((B, 1, 128), jnp.float32),
        grid=(B, n_a),
        in_specs=[pl.BlockSpec((1, C5, ta), lambda b, a: (b, 0, a)),
                  pl.BlockSpec((8, ta), lambda b, a: (0, a)),
                  pl.BlockSpec((1, 4, ta), lambda b, a: (b, 0, a)),
                  pl.BlockSpec((1, C1, ta), lambda b, a: (b, 0, a)),
                  pl.BlockSpec((1, 1, ta), lambda b, a: (b, 0, a))],
        out_specs=pl.BlockSpec((1, 1, 128), lambda b, a: (b, 0, 0)),   # resident accumulator
        compiler_params=pltpu.CompilerParams(
            dimension_semantics=("parallel", "arbitrary")),
    )(raw, anc, tgt_box, tgt_ct, fg)


# TODO(synk): dynamic_k_matching uses data-dependent top-k sizes and in-place boolean
# scatter; no clean Pallas equivalent — implemented in plain JAX with fixed-shape top-k
# and rank-based selection (exactly dynamic_k anchors per GT, matching torch.topk semantics).
def _dynamic_k_match_single(cost, iou, union, gt_valid, gt_boxes, gt_cls, num_classes):
    G, A = cost.shape
    k = min(10, A)
    topk_iou, _ = lax.top_k(iou, k)                                      # (G, k)
    dynamic_ks = jnp.clip(jnp.sum(topk_iou, axis=1).astype(jnp.int32), 1, k)
    _, topk_idx = lax.top_k(-cost, k)                                    # k smallest costs
    sel = (jnp.arange(k)[None, :] < dynamic_ks[:, None]).astype(jnp.float32)   # (G, k)
    matching = jnp.zeros((G, A), jnp.float32).at[
        jnp.arange(G)[:, None], topk_idx].set(sel)                       # exactly dynamic_k
    matching = matching * gt_valid[:, None] * union[None, :]
    multi = jnp.sum(matching, axis=0) > 1.0                              # anchors matched >1 GT
    best_gt = jnp.argmin(cost, axis=0)                                   # (A,)
    onehot_best = jax.nn.one_hot(best_gt, G, axis=0, dtype=jnp.float32)  # (G, A)
    matching = jnp.where(multi[None, :], onehot_best, matching)
    fg = (jnp.sum(matching, axis=0) > 0.0).astype(jnp.float32)           # final is_in_union
    match_gt_index = jnp.argmax(matching, axis=0)                        # (A,)
    match_iou = jnp.sum(matching * iou, axis=0)                          # (A,)
    tgt_box = gt_boxes[match_gt_index].T                                 # (4, A)
    tgt_cls = (jax.nn.one_hot(gt_cls[match_gt_index], num_classes, dtype=jnp.float32)
               * match_iou[:, None]).T                                   # (C, A)
    return fg[None, :], tgt_box, tgt_cls


def yolox_loss(preds, gt_boxes, gt_cls, gt_valid, num_classes, strides=STRIDES):
    """preds: list of [B, 5+C, H, W]; gt_boxes [B,G,4] (cx,cy,w,h); gt_cls [B,G]; gt_valid [B,G]."""
    B = preds[0].shape[0]
    C5 = num_classes + 5
    raws, gxs, gys, sts = [], [], [], []
    for p, s in zip(preds, strides):
        _, _, H, W = p.shape
        raws.append(p.reshape(B, C5, H * W))
        ii, jj = jnp.meshgrid(jnp.arange(H), jnp.arange(W), indexing="ij")
        gxs.append(jj.reshape(-1).astype(jnp.float32))
        gys.append(ii.reshape(-1).astype(jnp.float32))
        sts.append(jnp.full((H * W,), float(s), jnp.float32))
    raw = jnp.concatenate(raws, axis=2).astype(jnp.float32)              # (B, 5+C, A)
    gx = jnp.concatenate(gxs)
    gy = jnp.concatenate(gys)
    st = jnp.concatenate(sts)
    A = raw.shape[2]

    # lane-dense anchor axis: pad A to a multiple of 128 and tile it (<= TA_CAP lanes / block)
    a128 = ((A + 127) // 128) * 128
    if a128 <= TA_CAP:
        ta = a_pad = a128
    else:
        ta = TA_CAP
        a_pad = ((A + ta - 1) // ta) * ta
    pad = a_pad - A
    if pad:
        raw = jnp.pad(raw, ((0, 0), (0, 0), (0, pad)))
        gx = jnp.pad(gx, (0, pad))
        gy = jnp.pad(gy, (0, pad))
        st = jnp.pad(st, (0, pad), constant_values=1.0)
    avalid = (jnp.arange(a_pad) < A).astype(jnp.float32)
    # packed per-anchor side table (one DMA): [gx, gy, s, avalid, cx, cy, rs, 0]
    cxa = (gx + 0.5) * st
    cya = (gy + 0.5) * st
    anc = jnp.stack([gx, gy, st, avalid, cxa, cya, RADIUS * st,
                     jnp.zeros_like(st)], axis=0)                        # (8, A_pad)

    G = gt_boxes.shape[1]
    gtb = gt_boxes.astype(jnp.float32)
    gvf = gt_valid.astype(jnp.float32)                                   # (B, G)
    shift = (1.0 - gvf) * 1e12                                           # padded GTs off-image
    gxc = gtb[..., 0] + shift
    gyc = gtb[..., 1] + shift
    gw = gtb[..., 2]
    gh = gtb[..., 3]
    gtinfo = jnp.stack([gxc, gyc,
                        gxc - 0.5 * gw, gyc - 0.5 * gh,
                        gxc + 0.5 * gw, gyc + 0.5 * gh,
                        gw * gh, gvf], axis=-1)                          # (B, G, 8)
    gt_onehot = jax.nn.one_hot(gt_cls, num_classes, dtype=jnp.float32)   # (B, G, C)

    cost, iou, union = assign_cost(gtinfo, gt_onehot, raw, anc, ta=ta)

    match_fn = jax.vmap(functools.partial(_dynamic_k_match_single, num_classes=num_classes))
    fg, tgt_box, tgt_cls = match_fn(cost, iou, union[:, 0, :], gvf, gtb, gt_cls)

    # stacked targets for one dense (1+C, TA) BCE slab inside the loss kernel
    tgt_ct = jnp.concatenate([fg, tgt_cls], axis=1)                      # (B, 1+C, A_pad)
    loss_rows = loss_sums(raw, anc, tgt_box, tgt_ct, fg, ta=ta)          # (B, 1, 128)
    batch_fg_num = jnp.maximum(jnp.sum(fg), 1.0)
    return jnp.sum(loss_rows) / batch_fg_num


# ----------------------------------------------------------------------------- demo


if __name__ == "__main__":
    key = jax.random.PRNGKey(0)
    B = 2
    num_classes = NUM_CLASSES
    C5 = num_classes + 5
    img = 128
    feats = [img // s for s in STRIDES]            # 16, 8, 4  ->  A = 256 + 64 + 16 = 336

    k_pred, k_xy, k_wh, k_cls = jax.random.split(key, 4)
    preds = []
    for i, f in enumerate(feats):
        preds.append(jax.random.normal(jax.random.fold_in(k_pred, i),
                                       (B, C5, f, f), jnp.float32))

    G = 8           # padded max GTs per image
    n_valid = 5     # actual GTs per image
    gt_xy = jax.random.uniform(k_xy, (B, G, 2), jnp.float32, 16.0, float(img) - 16.0)
    gt_wh = jax.random.uniform(k_wh, (B, G, 2), jnp.float32, 8.0, 48.0)
    gt_boxes = jnp.concatenate([gt_xy, gt_wh], axis=-1)              # (B, G, 4)
    gt_cls = jax.random.randint(k_cls, (B, G), 0, num_classes)       # (B, G)
    gt_valid = (jnp.arange(G)[None, :] < n_valid).astype(jnp.float32) * jnp.ones((B, 1),
                                                                                 jnp.float32)

    loss = yolox_loss(preds, gt_boxes, gt_cls, gt_valid, num_classes, STRIDES)
    loss = jax.block_until_ready(loss)
    assert jnp.isfinite(loss)
    print("KERNEL_OK")
</pallas_src>

<mosaic_0001>
module attributes {stable_mosaic.version = 11 : i64} {
  func.func @_assign_cost_kernel(%arg0: i32, %arg1: i32, %arg2: memref<1x8x8xf32, #tpu.memory_space<vmem>>, %arg3: memref<1x8x4xf32, #tpu.memory_space<vmem>>, %arg4: memref<1x9x384xf32, #tpu.memory_space<vmem>>, %arg5: memref<8x384xf32, #tpu.memory_space<vmem>>, %arg6: memref<1x8x384xf32, #tpu.memory_space<vmem>>, %arg7: memref<1x8x384xf32, #tpu.memory_space<vmem>>, %arg8: memref<1x1x384xf32, #tpu.memory_space<vmem>>) attributes {dimension_semantics = [#tpu.dimension_semantics<parallel>, #tpu.dimension_semantics<parallel>], iteration_bounds = array<i64: 2, 1>, scalar_prefetch = 0 : i64, scratch_operands = 0 : i64, tpu.core_type = #tpu.core_type<tc>, window_params = [{transform_indices = @transform_0, window_bounds = array<i64: 1, 8, 8>}, {transform_indices = @transform_1, window_bounds = array<i64: 1, 8, 4>}, {transform_indices = @transform_2, window_bounds = array<i64: 1, 9, 384>}, {transform_indices = @transform_3, window_bounds = array<i64: 8, 384>}, {transform_indices = @transform_4, window_bounds = array<i64: 1, 8, 384>}, {transform_indices = @transform_5, window_bounds = array<i64: 1, 8, 384>}, {transform_indices = @transform_6, window_bounds = array<i64: 1, 1, 384>}]} {
    %c0 = arith.constant 0 : index
    %c0_0 = arith.constant 0 : index
    %c0_1 = arith.constant 0 : index
    %0 = vector.load %arg4[%c0, %c0_0, %c0_1] : memref<1x9x384xf32, #tpu.memory_space<vmem>>, vector<1x9x384xf32>
    %1 = vector.shape_cast %0 : vector<1x9x384xf32> to vector<9x384xf32>
    %c0_2 = arith.constant 0 : index
    %c0_3 = arith.constant 0 : index
    %2 = vector.load %arg5[%c0_2, %c0_3] : memref<8x384xf32, #tpu.memory_space<vmem>>, vector<8x384xf32>
    %3 = vector.extract_strided_slice %2 {offsets = [2, 0], sizes = [1, 384], strides = [1, 1]} : vector<8x384xf32> to vector<1x384xf32>
    %4 = vector.extract_strided_slice %2 {offsets = [3, 0], sizes = [1, 384], strides = [1, 1]} : vector<8x384xf32> to vector<1x384xf32>
    %5 = vector.extract_strided_slice %2 {offsets = [4, 0], sizes = [1, 384], strides = [1, 1]} : vector<8x384xf32> to vector<1x384xf32>
    %6 = vector.extract_strided_slice %2 {offsets = [5, 0], sizes = [1, 384], strides = [1, 1]} : vector<8x384xf32> to vector<1x384xf32>
    %7 = vector.extract_strided_slice %2 {offsets = [6, 0], sizes = [1, 384], strides = [1, 1]} : vector<8x384xf32> to vector<1x384xf32>
    %8 = vector.extract_strided_slice %1 {offsets = [0, 0], sizes = [2, 384], strides = [1, 1]} : vector<9x384xf32> to vector<2x384xf32>
    %9 = vector.extract_strided_slice %2 {offsets = [0, 0], sizes = [2, 384], strides = [1, 1]} : vector<8x384xf32> to vector<2x384xf32>
    %10 = arith.addf %8, %9 : vector<2x384xf32>
    %11 = vector.broadcast %3 : vector<1x384xf32> to vector<2x384xf32>
    %12 = arith.mulf %10, %11 : vector<2x384xf32>
    %13 = vector.extract_strided_slice %1 {offsets = [2, 0], sizes = [2, 384], strides = [1, 1]} : vector<9x384xf32> to vector<2x384xf32>
    %14 = math.exp %13 : vector<2x384xf32>
    %15 = vector.broadcast %3 : vector<1x384xf32> to vector<2x384xf32>
    %16 = arith.mulf %14, %15 : vector<2x384xf32>
    %cst = arith.constant 5.000000e-01 : f32
    %17 = vector.broadcast %cst : f32 to vector<2x384xf32>
    %18 = arith.mulf %17, %16 : vector<2x384xf32>
    %19 = arith.subf %12, %18 : vector<2x384xf32>
    %cst_4 = arith.constant 5.000000e-01 : f32
    %20 = vector.broadcast %cst_4 : f32 to vector<2x384xf32>
    %21 = arith.mulf %20, %16 : vector<2x384xf32>
    %22 = arith.addf %12, %21 : vector<2x384xf32>
    %23 = vector.extract_strided_slice %16 {offsets = [0, 0], sizes = [1, 384], strides = [1, 1]} : vector<2x384xf32> to vector<1x384xf32>
    %24 = vector.extract_strided_slice %16 {offsets = [1, 0], sizes = [1, 384], strides = [1, 1]} : vector<2x384xf32> to vector<1x384xf32>
    %25 = arith.mulf %23, %24 : vector<1x384xf32>
    %26 = vector.extract_strided_slice %1 {offsets = [4, 0], sizes = [1, 384], strides = [1, 1]} : vector<9x384xf32> to vector<1x384xf32>
    %27 = vector.extract_strided_slice %1 {offsets = [5, 0], sizes = [4, 384], strides = [1, 1]} : vector<9x384xf32> to vector<4x384xf32>
    %28 = arith.negf %27 : vector<4x384xf32>
    %29 = math.exp %28 : vector<4x384xf32>
    %cst_5 = arith.constant 1.000000e+00 : f32
    %30 = vector.broadcast %cst_5 : f32 to vector<4x384xf32>
    %31 = arith.addf %30, %29 : vector<4x384xf32>
    %32 = arith.divf %30, %31 : vector<4x384xf32>
    %33 = arith.negf %26 : vector<1x384xf32>
    %34 = math.exp %33 : vector<1x384xf32>
    %cst_6 = arith.constant 1.000000e+00 : f32
    %35 = vector.broadcast %cst_6 : f32 to vector<1x384xf32>
    %36 = arith.addf %35, %34 : vector<1x384xf32>
    %37 = arith.divf %35, %36 : vector<1x384xf32>
    %38 = vector.broadcast %37 : vector<1x384xf32> to vector<4x384xf32>
    %39 = arith.mulf %32, %38 : vector<4x384xf32>
    %40 = math.sqrt %39 : vector<4x384xf32>
    %cst_7 = arith.constant 9.99999971E-10 : f32
    %cst_8 = arith.constant 1.000000e+00 : f32
    %41 = vector.broadcast %cst_7 : f32 to vector<4x384xf32>
    %42 = arith.maximumf %41, %40 : vector<4x384xf32>
    %43 = vector.broadcast %cst_8 : f32 to vector<4x384xf32>
    %44 = arith.minimumf %43, %42 : vector<4x384xf32>
    %45 = math.log %44 : vector<4x384xf32>
    %cst_9 = arith.constant 0.000000e+00 : f32
    %46 = vector.broadcast %cst_9 : f32 to vector<4x384xf32>
    %47 = arith.subf %46, %44 : vector<4x384xf32>
    %48 = math.log1p %47 : vector<4x384xf32>
    %cst_10 = arith.constant dense<0.000000e+00> : vector<384xf32>
    %49 = vector.multi_reduction <add>, %48, %cst_10 [0] : vector<4x384xf32> to vector<384xf32>
    %50 = vector.shape_cast %49 : vector<384xf32> to vector<1x384xf32>
    %c0_11 = arith.constant 0 : index
    %c0_12 = arith.constant 0 : index
    %c0_13 = arith.constant 0 : index
    %51 = vector.load %arg3[%c0_11, %c0_12, %c0_13] : memref<1x8x4xf32, #tpu.memory_space<vmem>>, vector<1x8x4xf32>
    %52 = vector.shape_cast %51 : vector<1x8x4xf32> to vector<8x4xf32>
    %53 = arith.truncf %52 : vector<8x4xf32> to vector<8x4xbf16>
    %54 = arith.subf %45, %48 : vector<4x384xf32>
    %55 = arith.truncf %54 : vector<4x384xf32> to vector<4x384xbf16>
    %cst_14 = arith.constant dense<0.000000e+00> : vector<8x384xf32>
    %56 = tpu.matmul %53, %55, %cst_14 {dimension_numbers = #tpu.dot_dimension_numbers<[1], [0], [0], [1], [0, 0, 1, 1], [], []>} : vector<8x4xbf16>, vector<4x384xbf16>, vector<8x384xf32> -> vector<8x384xf32>
    %c0_15 = arith.constant 0 : index
    %c0_16 = arith.constant 0 : index
    %c0_17 = arith.constant 0 : index
    %57 = vector.load %arg2[%c0_15, %c0_16, %c0_17] : memref<1x8x8xf32, #tpu.memory_space<vmem>>, vector<1x8x8xf32>
    %58 = vector.shape_cast %57 : vector<1x8x8xf32> to vector<8x8xf32>
    %59 = vector.extract_strided_slice %58 {offsets = [0, 0], sizes = [8, 1], strides = [1, 1]} : vector<8x8xf32> to vector<8x1xf32>
    %60 = vector.extract_strided_slice %58 {offsets = [0, 1], sizes = [8, 1], strides = [1, 1]} : vector<8x8xf32> to vector<8x1xf32>
    %61 = vector.extract_strided_slice %58 {offsets = [0, 2], sizes = [8, 1], strides = [1, 1]} : vector<8x8xf32> to vector<8x1xf32>
    %62 = vector.extract_strided_slice %58 {offsets = [0, 3], sizes = [8, 1], strides = [1, 1]} : vector<8x8xf32> to vector<8x1xf32>
    %63 = vector.extract_strided_slice %58 {offsets = [0, 4], sizes = [8, 1], strides = [1, 1]} : vector<8x8xf32> to vector<8x1xf32>
    %64 = vector.extract_strided_slice %58 {offsets = [0, 5], sizes = [8, 1], strides = [1, 1]} : vector<8x8xf32> to vector<8x1xf32>
    %65 = vector.extract_strided_slice %58 {offsets = [0, 6], sizes = [8, 1], strides = [1, 1]} : vector<8x8xf32> to vector<8x1xf32>
    %66 = vector.extract_strided_slice %58 {offsets = [0, 7], sizes = [8, 1], strides = [1, 1]} : vector<8x8xf32> to vector<8x1xf32>
    %67 = vector.broadcast %5 : vector<1x384xf32> to vector<8x384xf32>
    %68 = vector.broadcast %61 : vector<8x1xf32> to vector<8x384xf32>
    %69 = arith.cmpf ogt, %67, %68 : vector<8x384xf32>
    %70 = vector.broadcast %6 : vector<1x384xf32> to vector<8x384xf32>
    %71 = vector.broadcast %62 : vector<8x1xf32> to vector<8x384xf32>
    %72 = arith.cmpf ogt, %70, %71 : vector<8x384xf32>
    %73 = arith.andi %69, %72 : vector<8x384xi1>
    %74 = vector.broadcast %5 : vector<1x384xf32> to vector<8x384xf32>
    %75 = vector.broadcast %63 : vector<8x1xf32> to vector<8x384xf32>
    %76 = arith.cmpf olt, %74, %75 : vector<8x384xf32>
    %77 = arith.andi %73, %76 : vector<8x384xi1>
    %78 = vector.broadcast %6 : vector<1x384xf32> to vector<8x384xf32>
    %79 = vector.broadcast %64 : vector<8x1xf32> to vector<8x384xf32>
    %80 = arith.cmpf olt, %78, %79 : vector<8x384xf32>
    %81 = arith.andi %77, %80 : vector<8x384xi1>
    %82 = vector.broadcast %5 : vector<1x384xf32> to vector<8x384xf32>
    %83 = vector.broadcast %59 : vector<8x1xf32> to vector<8x384xf32>
    %84 = arith.subf %82, %83 : vector<8x384xf32>
    %85 = math.absf %84 : vector<8x384xf32>
    %86 = vector.broadcast %7 : vector<1x384xf32> to vector<8x384xf32>
    %87 = arith.cmpf olt, %85, %86 : vector<8x384xf32>
    %88 = vector.broadcast %6 : vector<1x384xf32> to vector<8x384xf32>
    %89 = vector.broadcast %60 : vector<8x1xf32> to vector<8x384xf32>
    %90 = arith.subf %88, %89 : vector<8x384xf32>
    %91 = math.absf %90 : vector<8x384xf32>
    %92 = vector.broadcast %7 : vector<1x384xf32> to vector<8x384xf32>
    %93 = arith.cmpf olt, %91, %92 : vector<8x384xf32>
    %94 = arith.andi %87, %93 : vector<8x384xi1>
    %95 = arith.andi %81, %94 : vector<8x384xi1>
    %96 = arith.ori %81, %94 : vector<8x384xi1>
    %97 = arith.extui %96 : vector<8x384xi1> to vector<8x384xi32>
    %98 = arith.sitofp %97 : vector<8x384xi32> to vector<8x384xf32>
    %cst_18 = arith.constant dense<0xFF800000> : vector<384xf32>
    %99 = vector.multi_reduction <maximumf>, %98, %cst_18 [0] : vector<8x384xf32> to vector<384xf32>
    %100 = vector.shape_cast %99 : vector<384xf32> to vector<1x384xf32>
    %101 = arith.mulf %100, %4 : vector<1x384xf32>
    %102 = vector.extract_strided_slice %22 {offsets = [0, 0], sizes = [1, 384], strides = [1, 1]} : vector<2x384xf32> to vector<1x384xf32>
    %103 = vector.broadcast %102 : vector<1x384xf32> to vector<8x384xf32>
    %104 = vector.broadcast %63 : vector<8x1xf32> to vector<8x384xf32>
    %105 = arith.minimumf %103, %104 : vector<8x384xf32>
    %106 = vector.extract_strided_slice %19 {offsets = [0, 0], sizes = [1, 384], strides = [1, 1]} : vector<2x384xf32> to vector<1x384xf32>
    %107 = vector.broadcast %106 : vector<1x384xf32> to vector<8x384xf32>
    %108 = vector.broadcast %61 : vector<8x1xf32> to vector<8x384xf32>
    %109 = arith.maximumf %107, %108 : vector<8x384xf32>
    %110 = arith.subf %105, %109 : vector<8x384xf32>
    %cst_19 = arith.constant 0.000000e+00 : f32
    %111 = vector.broadcast %cst_19 : f32 to vector<8x384xf32>
    %112 = arith.maximumf %110, %111 : vector<8x384xf32>
    %113 = vector.extract_strided_slice %22 {offsets = [1, 0], sizes = [1, 384], strides = [1, 1]} : vector<2x384xf32> to vector<1x384xf32>
    %114 = vector.broadcast %113 : vector<1x384xf32> to vector<8x384xf32>
    %115 = vector.broadcast %64 : vector<8x1xf32> to vector<8x384xf32>
    %116 = arith.minimumf %114, %115 : vector<8x384xf32>
    %117 = vector.extract_strided_slice %19 {offsets = [1, 0], sizes = [1, 384], strides = [1, 1]} : vector<2x384xf32> to vector<1x384xf32>
    %118 = vector.broadcast %117 : vector<1x384xf32> to vector<8x384xf32>
    %119 = vector.broadcast %62 : vector<8x1xf32> to vector<8x384xf32>
    %120 = arith.maximumf %118, %119 : vector<8x384xf32>
    %121 = arith.subf %116, %120 : vector<8x384xf32>
    %cst_20 = arith.constant 0.000000e+00 : f32
    %122 = vector.broadcast %cst_20 : f32 to vector<8x384xf32>
    %123 = arith.maximumf %121, %122 : vector<8x384xf32>
    %124 = arith.mulf %112, %123 : vector<8x384xf32>
    %125 = vector.broadcast %65 : vector<8x1xf32> to vector<8x384xf32>
    %126 = vector.broadcast %25 : vector<1x384xf32> to vector<8x384xf32>
    %127 = arith.addf %125, %126 : vector<8x384xf32>
    %128 = arith.subf %127, %124 : vector<8x384xf32>
    %cst_21 = arith.constant 1.000000e-16 : f32
    %129 = vector.broadcast %cst_21 : f32 to vector<8x384xf32>
    %130 = arith.addf %128, %129 : vector<8x384xf32>
    %131 = arith.divf %124, %130 : vector<8x384xf32>
    %cst_22 = arith.constant 0.000000e+00 : f32
    %132 = vector.broadcast %cst_22 : f32 to vector<8x384xf32>
    %133 = arith.subf %132, %56 : vector<8x384xf32>
    %134 = vector.broadcast %50 : vector<1x384xf32> to vector<8x384xf32>
    %135 = arith.subf %133, %134 : vector<8x384xf32>
    %cst_23 = arith.constant 9.99999993E-9 : f32
    %136 = vector.broadcast %cst_23 : f32 to vector<8x384xf32>
    %137 = arith.addf %131, %136 : vector<8x384xf32>
    %138 = math.log %137 : vector<8x384xf32>
    %cst_24 = arith.constant 3.000000e+00 : f32
    %139 = vector.broadcast %cst_24 : f32 to vector<8x384xf32>
    %140 = arith.mulf %139, %138 : vector<8x384xf32>
    %141 = arith.subf %135, %140 : vector<8x384xf32>
    %cst_25 = arith.constant 1.000000e+05 : f32
    %142 = vector.broadcast %cst_25 : f32 to vector<8x384xf32>
    %143 = arith.addf %141, %142 : vector<8x384xf32>
    %144 = arith.select %95, %141, %143 : vector<8x384xi1>, vector<8x384xf32>
    %cst_26 = arith.constant 1.000000e+00 : f32
    %145 = vector.broadcast %cst_26 : f32 to vector<8x1xf32>
    %146 = arith.subf %145, %66 : vector<8x1xf32>
    %cst_27 = arith.constant 1.000000e+09 : f32
    %147 = vector.broadcast %cst_27 : f32 to vector<8x1xf32>
    %148 = arith.mulf %147, %146 : vector<8x1xf32>
    %149 = vector.broadcast %148 : vector<8x1xf32> to vector<8x384xf32>
    %150 = arith.addf %144, %149 : vector<8x384xf32>
    %cst_28 = arith.constant 1.000000e+00 : f32
    %151 = vector.broadcast %cst_28 : f32 to vector<1x384xf32>
    %152 = arith.subf %151, %101 : vector<1x384xf32>
    %cst_29 = arith.constant 1.000000e+09 : f32
    %153 = vector.broadcast %cst_29 : f32 to vector<1x384xf32>
    %154 = arith.mulf %153, %152 : vector<1x384xf32>
    %155 = vector.broadcast %154 : vector<1x384xf32> to vector<8x384xf32>
    %156 = arith.addf %150, %155 : vector<8x384xf32>
    %c0_30 = arith.constant 0 : index
    %c0_31 = arith.constant 0 : index
    %c0_32 = arith.constant 0 : index
    %157 = vector.load %arg6[%c0_30, %c0_31, %c0_32] : memref<1x8x384xf32, #tpu.memory_space<vmem>>, vector<1x8x384xf32>
    %158 = vector.shape_cast %157 : vector<1x8x384xf32> to vector<8x384xf32>
    %159 = vector.shape_cast %156 : vector<8x384xf32> to vector<1x8x384xf32>
    tpu.vector_store %arg6[%c0_30, %c0_31, %c0_32], %159 {strides = array<i32>} : memref<1x8x384xf32, #tpu.memory_space<vmem>>, vector<1x8x384xf32>,
    %160 = vector.broadcast %66 : vector<8x1xf32> to vector<8x384xf32>
    %161 = arith.mulf %131, %160 : vector<8x384xf32>
    %162 = vector.broadcast %101 : vector<1x384xf32> to vector<8x384xf32>
    %163 = arith.mulf %161, %162 : vector<8x384xf32>
    %c0_33 = arith.constant 0 : index
    %c0_34 = arith.constant 0 : index
    %c0_35 = arith.constant 0 : index
    %164 = vector.load %arg7[%c0_33, %c0_34, %c0_35] : memref<1x8x384xf32, #tpu.memory_space<vmem>>, vector<1x8x384xf32>
    %165 = vector.shape_cast %164 : vector<1x8x384xf32> to vector<8x384xf32>
    %166 = vector.shape_cast %163 : vector<8x384xf32> to vector<1x8x384xf32>
    tpu.vector_store %arg7[%c0_33, %c0_34, %c0_35], %166 {strides = array<i32>} : memref<1x8x384xf32, #tpu.memory_space<vmem>>, vector<1x8x384xf32>,
    %c0_36 = arith.constant 0 : index
    %c0_37 = arith.constant 0 : index
    %c0_38 = arith.constant 0 : index
    %167 = vector.load %arg8[%c0_36, %c0_37, %c0_38] : memref<1x1x384xf32, #tpu.memory_space<vmem>>, vector<1x1x384xf32>
    %168 = vector.shape_cast %167 : vector<1x1x384xf32> to vector<1x384xf32>
    %169 = vector.shape_cast %101 : vector<1x384xf32> to vector<1x1x384xf32>
    tpu.vector_store %arg8[%c0_36, %c0_37, %c0_38], %169 {strides = array<i32>} : memref<1x1x384xf32, #tpu.memory_space<vmem>>, vector<1x1x384xf32>,
    return
  }
  func.func @transform_0(%arg0: i32, %arg1: i32) -> (i32, i32, i32) {
    %c0_i32 = arith.constant 0 : i32
    %c0_i32_0 = arith.constant 0 : i32
    %c0_i32_1 = arith.constant 0 : i32
    return %arg0, %c0_i32, %c0_i32_0 : i32, i32, i32
  }
  func.func @transform_1(%arg0: i32, %arg1: i32) -> (i32, i32, i32) {
    %c0_i32 = arith.constant 0 : i32
    %c0_i32_0 = arith.constant 0 : i32
    %c0_i32_1 = arith.constant 0 : i32
    return %arg0, %c0_i32, %c0_i32_0 : i32, i32, i32
  }
  func.func @transform_2(%arg0: i32, %arg1: i32) -> (i32, i32, i32) {
    %c0_i32 = arith.constant 0 : i32
    %c0_i32_0 = arith.constant 0 : i32
    return %arg0, %c0_i32, %arg1 : i32, i32, i32
  }
  func.func @transform_3(%arg0: i32, %arg1: i32) -> (i32, i32) {
    %c0_i32 = arith.constant 0 : i32
    %c0_i32_0 = arith.constant 0 : i32
    return %c0_i32, %arg1 : i32, i32
  }
  func.func @transform_4(%arg0: i32, %arg1: i32) -> (i32, i32, i32) {
    %c0_i32 = arith.constant 0 : i32
    %c0_i32_0 = arith.constant 0 : i32
    return %arg0, %c0_i32, %arg1 : i32, i32, i32
  }
  func.func @transform_5(%arg0: i32, %arg1: i32) -> (i32, i32, i32) {
    %c0_i32 = arith.constant 0 : i32
    %c0_i32_0 = arith.constant 0 : i32
    return %arg0, %c0_i32, %arg1 : i32, i32, i32
  }
  func.func @transform_6(%arg0: i32, %arg1: i32) -> (i32, i32, i32) {
    %c0_i32 = arith.constant 0 : i32
    %c0_i32_0 = arith.constant 0 : i32
    return %arg0, %c0_i32, %arg1 : i32, i32, i32
  }
}

</mosaic_0001>

<llo_original>
// kernel: tpu_custom_call.1
$region0: #{tpu_custom_call.1}
  #allocation0 [shape = 'u32[]', space=smem, size = 0x4, offset = 0x4, fixed_abs, tag = 'smem constant byte address 0x4 - core index']
  #allocation1 [shape = 'u32[144,128]{1,0:T(1,128)}', space=vmem, size = 0x12000, scoped, tag = 'internal scratch']
  %s0 = inlined_call_operand.vmem [shape: f32[2,8,8], index: 0, kind: input, shape index: {}]
  %s1 = inlined_call_operand.vmem [shape: f32[2,8,4], index: 1, kind: input, shape index: {}]
  %s2 = inlined_call_operand.vmem [shape: f32[2,9,384], index: 2, kind: input, shape index: {}]
  %s3 = inlined_call_operand.vmem [shape: f32[8,384], index: 3, kind: input, shape index: {}]
  %s4 = inlined_call_operand.hbm [shape: f32[2,8,384], index: 4, kind: output, shape index: {0}]
  %s5 = inlined_call_operand.hbm [shape: f32[2,8,384], index: 5, kind: output, shape index: {1}]
  %s6 = inlined_call_operand.hbm [shape: f32[2,1,384], index: 6, kind: output, shape index: {2}]
  %7 = xla_tuple %s4, %s5, %s6
  %s8 = sld [smem:[#allocation0]]
  $region65: #{tpu_custom_call.1} parent=0
    _
  %s10 = ssub.s32 1, %s8
  %s11 = scalar_select 0, %s10, %s8
  $region1: #{tpu_custom_call.1} parent=0
    #allocation2 [shape = 'u8[24576]{0}', space=vmem, size = 0x6000, scoped, tag = 'output window, operand 0']
    #allocation3 [shape = 's32[2]{0}', space=sflag, size = 0x8, scoped, tag = 'scoped memory for tpu_custom_call.1']
    #allocation4 [shape = 'u8[24576]{0}', space=vmem, size = 0x6000, scoped, tag = 'output window, operand 1']
    #allocation5 [shape = 's32[2]{0}', space=sflag, size = 0x8, scoped, tag = 'scoped memory for tpu_custom_call.1']
    #allocation6 [shape = 'u8[3072]{0}', space=vmem, size = 0xc00, scoped, tag = 'output window, operand 2']
    %12 = vsyncpa [#allocation3], 0
    %s13 = scalar_lea.sflag [#allocation3], 1
    %14 = vsyncpa %s13, 0
    %15 = vsyncpa [#allocation5], 0
    %s16 = scalar_lea.sflag [#allocation5], 1
    %17 = vsyncpa %s16, 0
    loop: start=0, step=1, limit=4
    $region2: #{tpu_custom_call.1} parent=1 // loop_pre_header
      _
    $region3: #{tpu_custom_call.1} parent=1 // loop_header
      %s19 = sphi 0, %s23
      %p20 = scmp.ge.s32.totalorder %s19, 4
      %s26 = sphi 0, %s38
      %s27 = sphi 0, %s34
      %s28 = sphi 0, %s26
      %s29 = sphi 0, %s27
      %s30 = sphi 0, %s28
      %s31 = sphi 0, %s29
      %s41 = sphi 0, %s43
      %s44 = sphi 0, %s41
      %s45 = sphi 0, %s44
      %s61 = sphi 0, %s45
      %s67 = sphi 0, %s69
      %s70 = sphi 0, %s67
      %s71 = sphi 0, %s70
      %s87 = sphi 0, %s71
      %s95 = sphi 0, %s97
      %s98 = sphi 0, %s95
      %s99 = sphi 0, %s98
      %s115 = sphi 0, %s99
      %s121 = sphi 0, %s123
      %s124 = sphi 0, %s121
      %s125 = sphi 0, %s124
      %s141 = sphi 0, %s125
      %s149 = sphi 0, %s151
      %s152 = sphi 0, %s149
      %s153 = sphi 0, %s152
      %s169 = sphi 0, %s153
      %s177 = sphi 0, %s179
      %s180 = sphi 0, %s177
      %s181 = sphi 0, %s180
      %s197 = sphi 0, %s181
      %s205 = sphi 0, %s207
      %s208 = sphi 0, %s205
      %s209 = sphi 0, %s208
      %s225 = sphi 0, %s209
    $region4: #{tpu_custom_call.1} parent=1 // loop_header_branch
      %22 = sbr.rel (%p20) target = $region8
    $region5: #{tpu_custom_call.1} parent=1 // loop_body
      %s24 = ssub.s32 %s19, 1
      %s25 = ssub.s32 %s19, 2
      %s32 = sadd.s32 1, %s27
      %p33 = scmp.ge.s32.totalorder %s32, 1
      %s34 = scalar_select %p33, 0, %s32
      %s35 = sadd.s32 1, %s26
      %s36 = scalar_select %p33, %s35, %s26
      %p37 = scmp.ge.s32.totalorder %s36, 2
      %s38 = scalar_select %p37, 0, %s36
      %s39 = ssub.s32 %s26, %s38
      %p40 = scmp.eq.s32.totalorder %s39, 0
      %s42 = sadd.s32 %s41, 1
      %s43 = scalar_select %p40, %s41, %s42
      %p46 = pneg %p40
      %p47 = scmp.eq.s32.totalorder %s19, 1
      %p48 = por %p46, %p47
      %p49 = scmp.ne.s32.totalorder %s41, %s44
      %p50 = scmp.eq.s32.totalorder %s19, 0
      %p51 = por %p49, %p50
      %p52 = scmp.ne.s32.totalorder %s41, %s44
      %p53 = scmp.eq.s32.totalorder %s24, 1
      %p54 = por %p52, %p53
      %p55 = scmp.ne.s32.totalorder %s44, %s45
      %p56 = scmp.eq.s32.totalorder %s24, 0
      %p57 = por %p55, %p56
      %p58 = scmp.ne.s32.totalorder %s44, %s45
      %p59 = scmp.eq.s32.totalorder %s25, 1
      %p60 = por %p58, %p59
      %p62 = scmp.ne.s32.totalorder %s45, %s61
      %p63 = scmp.eq.s32.totalorder %s25, 0
      %p64 = por %p62, %p63
      %s65 = ssub.s32 %s26, %s38
      %p66 = scmp.eq.s32.totalorder %s65, 0
      %s68 = sadd.s32 %s67, 1
      %s69 = scalar_select %p66, %s67, %s68
      %p72 = pneg %p66
      %p73 = scmp.eq.s32.totalorder %s19, 1
      %p74 = por %p72, %p73
      %p75 = scmp.ne.s32.totalorder %s67, %s70
      %p76 = scmp.eq.s32.totalorder %s19, 0
      %p77 = por %p75, %p76
      %p78 = scmp.ne.s32.totalorder %s67, %s70
      %p79 = scmp.eq.s32.totalorder %s24, 1
      %p80 = por %p78, %p79
      %p81 = scmp.ne.s32.totalorder %s70, %s71
      %p82 = scmp.eq.s32.totalorder %s24, 0
      %p83 = por %p81, %p82
      %p84 = scmp.ne.s32.totalorder %s70, %s71
      %p85 = scmp.eq.s32.totalorder %s25, 1
      %p86 = por %p84, %p85
      %p88 = scmp.ne.s32.totalorder %s71, %s87
      %p89 = scmp.eq.s32.totalorder %s25, 0
      %p90 = por %p88, %p89
      %s91 = ssub.s32 %s26, %s38
      %s92 = ssub.s32 %s27, %s34
      %s93 = sor.u32 %s91, %s92
      %p94 = scmp.eq.s32.totalorder %s93, 0
      %s96 = sadd.s32 %s95, 1
      %s97 = scalar_select %p94, %s95, %s96
      %p100 = pneg %p94
      %p101 = scmp.eq.s32.totalorder %s19, 1
      %p102 = por %p100, %p101
      %p103 = scmp.ne.s32.totalorder %s95, %s98
      %p104 = scmp.eq.s32.totalorder %s19, 0
      %p105 = por %p103, %p104
      %p106 = scmp.ne.s32.totalorder %s95, %s98
      %p107 = scmp.eq.s32.totalorder %s24, 1
      %p108 = por %p106, %p107
      %p109 = scmp.ne.s32.totalorder %s98, %s99
      %p110 = scmp.eq.s32.totalorder %s24, 0
      %p111 = por %p109, %p110
      %p112 = scmp.ne.s32.totalorder %s98, %s99
      %p113 = scmp.eq.s32.totalorder %s25, 1
      %p114 = por %p112, %p113
      %p116 = scmp.ne.s32.totalorder %s99, %s115
      %p117 = scmp.eq.s32.totalorder %s25, 0
      %p118 = por %p116, %p117
      %s119 = ssub.s32 %s27, %s34
      %p120 = scmp.eq.s32.totalorder %s119, 0
      %s122 = sadd.s32 %s121, 1
      %s123 = scalar_select %p120, %s121, %s122
      %p126 = pneg %p120
      %p127 = scmp.eq.s32.totalorder %s19, 1
      %p128 = por %p126, %p127
      %p129 = scmp.ne.s32.totalorder %s121, %s124
      %p130 = scmp.eq.s32.totalorder %s19, 0
      %p131 = por %p129, %p130
      %p132 = scmp.ne.s32.totalorder %s121, %s124
      %p133 = scmp.eq.s32.totalorder %s24, 1
      %p134 = por %p132, %p133
      %p135 = scmp.ne.s32.totalorder %s124, %s125
      %p136 = scmp.eq.s32.totalorder %s24, 0
      %p137 = por %p135, %p136
      %p138 = scmp.ne.s32.totalorder %s124, %s125
      %p139 = scmp.eq.s32.totalorder %s25, 1
      %p140 = por %p138, %p139
      %p142 = scmp.ne.s32.totalorder %s125, %s141
      %p143 = scmp.eq.s32.totalorder %s25, 0
      %p144 = por %p142, %p143
      %s145 = ssub.s32 %s26, %s38
      %s146 = ssub.s32 %s27, %s34
      %s147 = sor.u32 %s145, %s146
      %p148 = scmp.eq.s32.totalorder %s147, 0
      %s150 = sadd.s32 %s149, 1
      %s151 = scalar_select %p148, %s149, %s150
      %p154 = pneg %p148
      %p155 = scmp.eq.s32.totalorder %s19, 1
      %p156 = por %p154, %p155
      %p157 = scmp.ne.s32.totalorder %s149, %s152
      %p158 = scmp.eq.s32.totalorder %s19, 0
      %p159 = por %p157, %p158
      %p160 = scmp.ne.s32.totalorder %s149, %s152
      %p161 = scmp.eq.s32.totalorder %s24, 1
      %p162 = por %p160, %p161
      %p163 = scmp.ne.s32.totalorder %s152, %s153
      %p164 = scmp.eq.s32.totalorder %s24, 0
      %p165 = por %p163, %p164
      %p166 = scmp.ne.s32.totalorder %s152, %s153
      %p167 = scmp.eq.s32.totalorder %s25, 1
      %p168 = por %p166, %p167
      %p170 = scmp.ne.s32.totalorder %s153, %s169
      %p171 = scmp.eq.s32.totalorder %s25, 0
      %p172 = por %p170, %p171
      %s173 = ssub.s32 %s26, %s38
      %s174 = ssub.s32 %s27, %s34
      %s175 = sor.u32 %s173, %s174
      %p176 = scmp.eq.s32.totalorder %s175, 0
      %s178 = sadd.s32 %s177, 1
      %s179 = scalar_select %p176, %s177, %s178
      %p182 = pneg %p176
      %p183 = scmp.eq.s32.totalorder %s19, 1
      %p184 = por %p182, %p183
      %p185 = scmp.ne.s32.totalorder %s177, %s180
      %p186 = scmp.eq.s32.totalorder %s19, 0
      %p187 = por %p185, %p186
      %p188 = scmp.ne.s32.totalorder %s177, %s180
      %p189 = scmp.eq.s32.totalorder %s24, 1
      %p190 = por %p188, %p189
      %p191 = scmp.ne.s32.totalorder %s180, %s181
      %p192 = scmp.eq.s32.totalorder %s24, 0
      %p193 = por %p191, %p192
      %p194 = scmp.ne.s32.totalorder %s180, %s181
      %p195 = scmp.eq.s32.totalorder %s25, 1
      %p196 = por %p194, %p195
      %p198 = scmp.ne.s32.totalorder %s181, %s197
      %p199 = scmp.eq.s32.totalorder %s25, 0
      %p200 = por %p198, %p199
      %s201 = ssub.s32 %s26, %s38
      %s202 = ssub.s32 %s27, %s34
      %s203 = sor.u32 %s201, %s202
      %p204 = scmp.eq.s32.totalorder %s203, 0
      %s206 = sadd.s32 %s205, 1
      %s207 = scalar_select %p204, %s205, %s206
      %p210 = pneg %p204
      %p211 = scmp.eq.s32.totalorder %s19, 1
      %p212 = por %p210, %p211
      %p213 = scmp.ne.s32.totalorder %s205, %s208
      %p214 = scmp.eq.s32.totalorder %s19, 0
      %p215 = por %p213, %p214
      %p216 = scmp.ne.s32.totalorder %s205, %s208
      %p217 = scmp.eq.s32.totalorder %s24, 1
      %p218 = por %p216, %p217
      %p219 = scmp.ne.s32.totalorder %s208, %s209
      %p220 = scmp.eq.s32.totalorder %s24, 0
      %p221 = por %p219, %p220
      %p222 = scmp.ne.s32.totalorder %s208, %s209
      %p223 = scmp.eq.s32.totalorder %s25, 1
      %p224 = por %p222, %p223
      %p226 = scmp.ne.s32.totalorder %s209, %s225
      %p227 = scmp.eq.s32.totalorder %s25, 0
      %p228 = por %p226, %p227
      %p229 = scmp.le.s32.totalorder 1, %s19
      %p230 = scmp.lt.s32.totalorder %s19, 3
      %p231 = pnand %p229, %p230
      %p232 = pneg %p231
      // Predicated region
      $region9: #{tpu_custom_call.1} parent=5 // pred_check
        _
      $region10: #{tpu_custom_call.1} parent=5 // pred_check_branch
        %234 = sbr.rel (%p231) target = $region12
      $region11: #{tpu_custom_call.1} parent=5 // pred_region
        %s235 = ssub.s32 %s19, 1
        // Predicated region
        $region13: #{tpu_custom_call.1} parent=11 // pred_check
          %p236 = pneg %p137
        $region14: #{tpu_custom_call.1} parent=11 // pred_check_branch
          %238 = sbr.rel (%p236) target = $region16
        $region15: #{tpu_custom_call.1} parent=11 // pred_region
          %s239 = smul.u32 3, %s29
          %p240 = scmp.lt.s32.totalorder %s239, 2
          %s241 = scalar_select %p240, %s239, 2
          %s242 = smul.addr %s241, 8
          %s243 = scalar_lea.vmem %s3, %s242
          %s244 = smul.u32 3, %s29
        $region16: #{tpu_custom_call.1} parent=11 // pred_fallthru
          _
      $region12: #{tpu_custom_call.1} parent=5 // pred_fallthru
        _
      %p245 = scmp.lt.s32.totalorder %s19, 2
      // Predicated region
      $region17: #{tpu_custom_call.1} parent=5 // pred_check
        %p246 = pneg %p245
      $region18: #{tpu_custom_call.1} parent=5 // pred_check_branch
        %248 = sbr.rel (%p246) target = $region20
      $region19: #{tpu_custom_call.1} parent=5 // pred_region
        // Predicated region
        $region21: #{tpu_custom_call.1} parent=19 // pred_check
          %p249 = pneg %p51
        $region22: #{tpu_custom_call.1} parent=19 // pred_check_branch
          %251 = sbr.rel (%p249) target = $region24
        $region23: #{tpu_custom_call.1} parent=19 // pred_region
          %p252 = scmp.lt.s32.totalorder %s26, 1
          %s253 = scalar_select %p252, %s26, 1
          %s254 = smul.addr %s253, 8
          %s255 = scalar_lea.vmem %s0, %s254
        $region24: #{tpu_custom_call.1} parent=19 // pred_fallthru
          _
        // Predicated region
        $region25: #{tpu_custom_call.1} parent=19 // pred_check
          %p256 = pneg %p77
        $region26: #{tpu_custom_call.1} parent=19 // pred_check_branch
          %258 = sbr.rel (%p256) target = $region28
        $region27: #{tpu_custom_call.1} parent=19 // pred_region
          %p259 = scmp.lt.s32.totalorder %s26, 1
          %s260 = scalar_select %p259, %s26, 1
          %s261 = smul.addr %s260, 8
          %s262 = scalar_lea.vmem %s1, %s261
        $region28: #{tpu_custom_call.1} parent=19 // pred_fallthru
          _
        // Predicated region
        $region29: #{tpu_custom_call.1} parent=19 // pred_check
          %p263 = pneg %p105
        $region30: #{tpu_custom_call.1} parent=19 // pred_check_branch
          %265 = sbr.rel (%p263) target = $region32
        $region31: #{tpu_custom_call.1} parent=19 // pred_region
          %s266 = smul.u32 3, %s27
          %p267 = scmp.lt.s32.totalorder %s26, 1
          %s268 = scalar_select %p267, %s26, 1
          %p269 = scmp.lt.s32.totalorder %s266, 2
          %s270 = scalar_select %p269, %s266, 2
          %s271 = smul.addr %s268, 6
          %s272 = sadd.s32 %s270, %s271
          %s273 = smul.addr %s272, 8
          %s274 = scalar_lea.vmem %s2, %s273
          %s275 = smul.u32 3, %s27
        $region32: #{tpu_custom_call.1} parent=19 // pred_fallthru
          _
      $region20: #{tpu_custom_call.1} parent=5 // pred_fallthru
        _
      %p276 = scmp.le.s32.totalorder 1, %s19
      %p277 = scmp.lt.s32.totalorder %s19, 3
      %p278 = pnand %p276, %p277
      %p279 = pneg %p278
      // Predicated region
      $region33: #{tpu_custom_call.1} parent=5 // pred_check
        _
      $region34: #{tpu_custom_call.1} parent=5 // pred_check_branch
        %281 = sbr.rel (%p278) target = $region36
      $region35: #{tpu_custom_call.1} parent=5 // pred_region
        %s282 = ssub.s32 %s19, 1
        %p283 = scmp.lt.s32.totalorder %s28, 1
        %s284 = scalar_select %p283, %s28, 1
        %s285 = smul.addr %s284, 8
        %s286 = scalar_lea.vmem %s0, %s285
        %p287 = pneg %p57
        %p288 = pneg %p54
        %p289 = scmp.lt.s32.totalorder %s28, 1
        %s290 = scalar_select %p289, %s28, 1
        %s291 = smul.addr %s290, 8
        %s292 = scalar_lea.vmem %s1, %s291
        %p293 = pneg %p83
        %p294 = pneg %p80
        %s295 = smul.u32 3, %s29
        %p296 = scmp.lt.s32.totalorder %s28, 1
        %s297 = scalar_select %p296, %s28, 1
        %p298 = scmp.lt.s32.totalorder %s295, 2
        %s299 = scalar_select %p298, %s295, 2
        %s300 = smul.addr %s297, 6
        %s301 = sadd.s32 %s299, %s300
        %s302 = smul.addr %s301, 8
        %s303 = scalar_lea.vmem %s2, %s302
        %p304 = pneg %p111
        %p305 = pneg %p108
        %s306 = smul.u32 3, %s29
        %p307 = scmp.lt.s32.totalorder %s306, 2
        %s308 = scalar_select %p307, %s306, 2
        %s309 = smul.addr %s308, 8
        %s310 = scalar_lea.vmem %s3, %s309
        %p311 = pneg %p137
        %p312 = pneg %p134
        %p313 = pneg %p165
        %p314 = pneg %p162
        %s315 = sand.u32 %s152, 1
        %s316 = scalar_lea.sflag [#allocation3], %s315
        %s317 = sand.u32 %s152, 1
        %s318 = smul.addr %s317, 24
        %s319 = scalar_lea.vmem [#allocation2], %s318
        %p320 = pneg %p193
        %p321 = pneg %p190
        %s322 = sand.u32 %s24, 1
        %s323 = scalar_lea.sflag [#allocation5], %s322
        %s324 = sand.u32 %s180, 1
        %s325 = smul.addr %s324, 24
        %s326 = scalar_lea.vmem [#allocation4], %s325
        %p327 = pneg %p221
        %p328 = pneg %p218
        %s329 = sand.u32 %s24, 1
        %s330 = scalar_lea.sflag [#allocation5], %s329
        %s331 = sand.u32 %s208, 1
        %s332 = smul.addr %s331, 3
        %s333 = scalar_lea.vmem [#allocation6], %s332
        %p334 = scmp.lt.s32.totalorder %s28, 1
        %s335 = scalar_select %p334, %s28, 1
        %s336 = smul.addr %s335, 8
        %s337 = scalar_lea.vmem %s0, %s336
        %p338 = scmp.lt.s32.totalorder %s28, 1
        %s339 = scalar_select %p338, %s28, 1
        %s340 = smul.addr %s339, 8
        %s341 = scalar_lea.vmem %s1, %s340
        %s342 = smul.u32 3, %s29
        %p343 = scmp.lt.s32.totalorder %s28, 1
        %s344 = scalar_select %p343, %s28, 1
        %p345 = scmp.lt.s32.totalorder %s342, 2
        %s346 = scalar_select %p345, %s342, 2
        %s347 = smul.addr %s344, 6
        %s348 = sadd.s32 %s346, %s347
        %s349 = smul.addr %s348, 8
        %s350 = scalar_lea.vmem %s2, %s349
        %s351 = smul.u32 3, %s29
        %s352 = smul.u32 3, %s29
        %p353 = scmp.lt.s32.totalorder %s352, 2
        %s354 = scalar_select %p353, %s352, 2
        %s355 = smul.addr %s354, 8
        %s356 = scalar_lea.vmem %s3, %s355
        %s357 = smul.u32 3, %s29
        %s358 = smul.u32 3, %s29
        %s359 = smul.u32 3, %s29
        %s360 = smul.u32 3, %s29
        %v362 = vld [vmem:[%s350] sm:$0xff]
        %v363 = vld [vmem:[%s350 + $0x8] sm:$0xff]
        %v364 = vld [vmem:[%s350 + $0x10] sm:$0xff]
        %v365 = vld [vmem:[%s350 + $0x18] sm:$0x1]
        %v366 = vld [vmem:[%s350 + $0x20] sm:$0x1]
        %v367 = vld [vmem:[%s350 + $0x28] sm:$0x1]
        %v368 = vld [vmem:[%s356] sm:$0xff]
        %v369 = vld [vmem:[%s356 + $0x8] sm:$0xff]
        %v370 = vld [vmem:[%s356 + $0x10] sm:$0xff]
        %v371 = vadd.f32 %v362, %v368
        %v372 = vadd.f32 %v363, %v369
        %v373 = vadd.f32 %v364, %v370
        %v374 = vlaneseq
        %v375 = vshrl.u32 %v374, 7
        %v376 = vsub.s32 2, %v375
        %v377 = vrot.slane %v368, %v376
        %v378 = vlaneseq
        %v379 = vshrl.u32 %v378, 7
        %v380 = vsub.s32 2, %v379
        %v381 = vrot.slane %v369, %v380
        %v382 = vlaneseq
        %v383 = vshrl.u32 %v382, 7
        %v384 = vsub.s32 2, %v383
        %v385 = vrot.slane %v370, %v384
        %v386 = vmul.f32 %v371, %v377
        %v387 = vmul.f32 %v372, %v381
        %v388 = vmul.f32 %v373, %v385
        %v389 = vmul.f32 %v362, 1.442695
        %v390 = vpow.pop %v389
        %v391 = vmul.f32 %v363, 1.442695
        %v392 = vpow.pop %v391
        %v393 = vmul.f32 %v364, 1.442695
        %v394 = vpow.pop %v393
        %v395 = vmul.f32 %v390, %v377
        %v396 = vmul.f32 %v392, %v381
        %v397 = vmul.f32 %v394, %v385
        %v398 = vmul.f32 %v395, 0.5
        %v399 = vmul.f32 %v396, 0.5
        %v400 = vmul.f32 %v397, 0.5
        %v404 = vrot.slane %v398, 2
        %v405 = vrot.slane %v399, 2
        %v406 = vrot.slane %v400, 2
        %v410 = vsub.f32 %v386, %v404
        %v411 = vsub.f32 %v387, %v405
        %v412 = vsub.f32 %v388, %v406
        %v413 = vadd.f32 %v386, %v404
        %v414 = vadd.f32 %v387, %v405
        %v415 = vadd.f32 %v388, %v406
        %v419 = vrot.slane %v395, 1
        %v420 = vrot.slane %v396, 1
        %v421 = vrot.slane %v397, 1
        %v425 = vmul.f32 %v395, %v419
        %v426 = vmul.f32 %v396, %v420
        %v427 = vmul.f32 %v397, %v421
        %v428 = vxor.u32 %v362, 2147483648
        %v429 = vxor.u32 %v363, 2147483648
        %v430 = vxor.u32 %v364, 2147483648
        %v431 = vxor.u32 %v365, 2147483648
        %v432 = vxor.u32 %v366, 2147483648
        %v433 = vxor.u32 %v367, 2147483648
        %v434 = vmul.f32 %v428, 1.442695
        %v435 = vpow.pop %v434
        %v436 = vmul.f32 %v429, 1.442695
        %v437 = vpow.pop %v436
        %v438 = vmul.f32 %v430, 1.442695
        %v439 = vpow.pop %v438
        %v440 = vmul.f32 %v431, 1.442695
        %v441 = vpow.pop %v440
        %v442 = vmul.f32 %v432, 1.442695
        %v443 = vpow.pop %v442
        %v444 = vmul.f32 %v433, 1.442695
        %v445 = vpow.pop %v444
        %v446 = vadd.f32 %v435, 1.0
        %v447 = vadd.f32 %v437, 1.0
        %v448 = vadd.f32 %v439, 1.0
        %v449 = vadd.f32 %v441, 1.0
        %v450 = vadd.f32 %v443, 1.0
        %v451 = vadd.f32 %v445, 1.0
        %v452 = vrcp.pop %v446
        %v453 = vmul.f32 1.0, %v452
        %v454 = vrcp.pop %v447
        %v455 = vmul.f32 1.0, %v454
        %v456 = vrcp.pop %v448
        %v457 = vmul.f32 1.0, %v456
        %v458 = vrcp.pop %v449
        %v459 = vmul.f32 1.0, %v458
        %v460 = vrcp.pop %v450
        %v461 = vmul.f32 1.0, %v460
        %v462 = vrcp.pop %v451
        %v463 = vmul.f32 1.0, %v462
        %v464 = vlaneseq
        %v465 = vshrl.u32 %v464, 7
        %v466 = vsub.s32 4, %v465
        %v467 = vrot.slane %v453, %v466
        %v468 = vlaneseq
        %v469 = vshrl.u32 %v468, 7
        %v470 = vsub.s32 4, %v469
        %v471 = vrot.slane %v455, %v470
        %v472 = vlaneseq
        %v473 = vshrl.u32 %v472, 7
        %v474 = vsub.s32 4, %v473
        %v475 = vrot.slane %v457, %v474
        %v476 = vmul.f32 %v453, %v467
        %v477 = vmul.f32 %v455, %v471
        %v478 = vmul.f32 %v457, %v475
        %v479 = vmul.f32 %v459, %v467
        %v480 = vmul.f32 %v461, %v471
        %v481 = vmul.f32 %v463, %v475
        %v482 = vrsqrt.pop %v476
        %v483 = vmul.f32 %v476, %v482
        %vm484 = vcmp.eq.f32.partialorder %v476, inf
        %v485 = vsel %vm484, %v476, %v483
        %vm486 = vcmp.eq.f32.partialorder %v476, 0.0
        %v487 = vand.u32 %v476, 2147483648
        %v488 = vsel %vm486, %v487, %v485
        %v489 = vrsqrt.pop %v477
        %v490 = vmul.f32 %v477, %v489
        %vm491 = vcmp.eq.f32.partialorder %v477, inf
        %v492 = vsel %vm491, %v477, %v490
        %vm493 = vcmp.eq.f32.partialorder %v477, 0.0
        %v494 = vand.u32 %v477, 2147483648
        %v495 = vsel %vm493, %v494, %v492
        %v496 = vrsqrt.pop %v478
        %v497 = vmul.f32 %v478, %v496
        %vm498 = vcmp.eq.f32.partialorder %v478, inf
        %v499 = vsel %vm498, %v478, %v497
        %vm500 = vcmp.eq.f32.partialorder %v478, 0.0
        %v501 = vand.u32 %v478, 2147483648
        %v502 = vsel %vm500, %v501, %v499
        %v503 = vrsqrt.pop %v479
        %v504 = vmul.f32 %v479, %v503
        %vm505 = vcmp.eq.f32.partialorder %v479, inf
        %v506 = vsel %vm505, %v479, %v504
        %vm507 = vcmp.eq.f32.partialorder %v479, 0.0
        %v508 = vand.u32 %v479, 2147483648
        %v509 = vsel %vm507, %v508, %v506
        %v510 = vrsqrt.pop %v480
        %v511 = vmul.f32 %v480, %v510
        %vm512 = vcmp.eq.f32.partialorder %v480, inf
        %v513 = vsel %vm512, %v480, %v511
        %vm514 = vcmp.eq.f32.partialorder %v480, 0.0
        %v515 = vand.u32 %v480, 2147483648
        %v516 = vsel %vm514, %v515, %v513
        %v517 = vrsqrt.pop %v481
        %v518 = vmul.f32 %v481, %v517
        %vm519 = vcmp.eq.f32.partialorder %v481, inf
        %v520 = vsel %vm519, %v481, %v518
        %vm521 = vcmp.eq.f32.partialorder %v481, 0.0
        %v522 = vand.u32 %v481, 2147483648
        %v523 = vsel %vm521, %v522, %v520
        %v524 = vmax.f32 %v488, 1e-09
        %v525 = vmax.f32 %v495, 1e-09
        %v526 = vmax.f32 %v502, 1e-09
        %v527 = vmax.f32 %v509, 1e-09
        %v528 = vmax.f32 %v516, 1e-09
        %v529 = vmax.f32 %v523, 1e-09
        %v530 = vmin.f32 %v524, 1.0
        %v531 = vmin.f32 %v525, 1.0
        %v532 = vmin.f32 %v526, 1.0
        %v533 = vmin.f32 %v527, 1.0
        %v534 = vmin.f32 %v528, 1.0
        %v535 = vmin.f32 %v529, 1.0
        %v536 = vlog2.pop %v530
        %v537 = vmul.f32 %v536, 0.6931472
        %v538 = vlog2.pop %v531
        %v539 = vmul.f32 %v538, 0.6931472
        %v540 = vlog2.pop %v532
        %v541 = vmul.f32 %v540, 0.6931472
        %v542 = vlog2.pop %v533
        %v543 = vmul.f32 %v542, 0.6931472
        %v544 = vlog2.pop %v534
        %v545 = vmul.f32 %v544, 0.6931472
        %v546 = vlog2.pop %v535
        %v547 = vmul.f32 %v546, 0.6931472
        %v548 = vsub.f32 0.0, %v530
        %v549 = vsub.f32 0.0, %v531
        %v550 = vsub.f32 0.0, %v532
        %v551 = vsub.f32 0.0, %v533
        %v552 = vsub.f32 0.0, %v534
        %v553 = vsub.f32 0.0, %v535
        %v554 = vadd.f32 %v548, 1.0
        %v555 = vlog2.pop %v554
        %v556 = vmul.f32 %v555, 0.6931472
        %v557 = vmul.f32 -0.5, %v548
        %v558 = vadd.f32 %v557, 1.0
        %v559 = vmul.f32 %v558, %v548
        %v560 = vand.u32 2147483647, %v548
        %vm561 = vcmp.lt.f32.partialorder %v560, 0.0004427343
        %v562 = vsel %vm561, %v559, %v556
        %v563 = vadd.f32 %v549, 1.0
        %v564 = vlog2.pop %v563
        %v565 = vmul.f32 %v564, 0.6931472
        %v566 = vmul.f32 -0.5, %v549
        %v567 = vadd.f32 %v566, 1.0
        %v568 = vmul.f32 %v567, %v549
        %v569 = vand.u32 2147483647, %v549
        %vm570 = vcmp.lt.f32.partialorder %v569, 0.0004427343
        %v571 = vsel %vm570, %v568, %v565
        %v572 = vadd.f32 %v550, 1.0
        %v573 = vlog2.pop %v572
        %v574 = vmul.f32 %v573, 0.6931472
        %v575 = vmul.f32 -0.5, %v550
        %v576 = vadd.f32 %v575, 1.0
        %v577 = vmul.f32 %v576, %v550
        %v578 = vand.u32 2147483647, %v550
        %vm579 = vcmp.lt.f32.partialorder %v578, 0.0004427343
        %v580 = vsel %vm579, %v577, %v574
        %v581 = vadd.f32 %v551, 1.0
        %v582 = vlog2.pop %v581
        %v583 = vmul.f32 %v582, 0.6931472
        %v584 = vmul.f32 -0.5, %v551
        %v585 = vadd.f32 %v584, 1.0
        %v586 = vmul.f32 %v585, %v551
        %v587 = vand.u32 2147483647, %v551
        %vm588 = vcmp.lt.f32.partialorder %v587, 0.0004427343
        %v589 = vsel %vm588, %v586, %v583
        %v590 = vadd.f32 %v552, 1.0
        %v591 = vlog2.pop %v590
        %v592 = vmul.f32 %v591, 0.6931472
        %v593 = vmul.f32 -0.5, %v552
        %v594 = vadd.f32 %v593, 1.0
        %v595 = vmul.f32 %v594, %v552
        %v596 = vand.u32 2147483647, %v552
        %vm597 = vcmp.lt.f32.partialorder %v596, 0.0004427343
        %v598 = vsel %vm597, %v595, %v592
        %v599 = vadd.f32 %v553, 1.0
        %v600 = vlog2.pop %v599
        %v601 = vmul.f32 %v600, 0.6931472
        %v602 = vmul.f32 -0.5, %v553
        %v603 = vadd.f32 %v602, 1.0
        %v604 = vmul.f32 %v603, %v553
        %v605 = vand.u32 2147483647, %v553
        %vm606 = vcmp.lt.f32.partialorder %v605, 0.0004427343
        %v607 = vsel %vm606, %v604, %v601
        %vm614 = vcmask 1042432
        %v615 = vrot.slane %v562, 5
        %v616 = vrot.slane %v589, 5
        %v617 = vsel %vm614, %v615, %v616
        %v618 = vrot.slane %v571, 5
        %v619 = vrot.slane %v598, 5
        %v620 = vsel %vm614, %v618, %v619
        %v621 = vrot.slane %v580, 5
        %v622 = vrot.slane %v607, 5
        %v623 = vsel %vm614, %v621, %v622
        %vm627 = vcmask 1043456
        %v628 = vsel %vm627, %v617, 0.0
        %v629 = vrot.slane %v628, 4
        %v630 = vadd.f32 %v628, %v629
        %v631 = vrot.slane %v630, 2
        %v632 = vadd.f32 %v630, %v631
        %v633 = vrot.slane %v632, 1
        %v634 = vadd.f32 %v632, %v633
        %v635 = vsel %vm627, %v620, 0.0
        %v636 = vrot.slane %v635, 4
        %v637 = vadd.f32 %v635, %v636
        %v638 = vrot.slane %v637, 2
        %v639 = vadd.f32 %v637, %v638
        %v640 = vrot.slane %v639, 1
        %v641 = vadd.f32 %v639, %v640
        %v642 = vsel %vm627, %v623, 0.0
        %v643 = vrot.slane %v642, 4
        %v644 = vadd.f32 %v642, %v643
        %v645 = vrot.slane %v644, 2
        %v646 = vadd.f32 %v644, %v645
        %v647 = vrot.slane %v646, 1
        %v648 = vadd.f32 %v646, %v647
        %v649 = vld [vmem:[%s341] sm:$0xff]
        %v650 = vpack.c.bf16 %v649, %v649
        %v651 = vsub.f32 %v537, %v562
        %v652 = vsub.f32 %v539, %v571
        %v653 = vsub.f32 %v541, %v580
        %v654 = vsub.f32 %v543, %v589
        %v655 = vsub.f32 %v545, %v598
        %v656 = vsub.f32 %v547, %v607
        %v657 = vpack.c.bf16 %v654, %v651
        %v658 = vpack.c.bf16 %v655, %v652
        %v659 = vpack.c.bf16 %v656, %v653
        %v661 = vshrl.u32 %v657, 16
        %v663 = vrot.slane %v661, 2
        %v664 = vshll.u32 %v657, 16
        %v666 = vrot.slane %v664, 3
        %v667 = vor.u32 %v663, %v666
        %v669 = vshrl.u32 %v658, 16
        %v671 = vrot.slane %v669, 2
        %v672 = vshll.u32 %v658, 16
        %v674 = vrot.slane %v672, 3
        %v675 = vor.u32 %v671, %v674
        %v677 = vshrl.u32 %v659, 16
        %v679 = vrot.slane %v677, 2
        %v680 = vshll.u32 %v659, 16
        %v682 = vrot.slane %v680, 3
        %v683 = vor.u32 %v679, %v682
        %vm684 = vcmask 31744
        %v686 = vsel %vm684, %v650, 0
        %vm688 = vcmask 1041408
        %v690 = vsel %vm688, %v667, 0
        %v693 = vsel %vm688, %v675, 0
        %v696 = vsel %vm688, %v683, 0
        %698 = vmatprep.subr.bf16.mxu0 0
        %699 = vmatpush1.bf16.msra.mxu0 0
        %700 = vmatprep.subr.bf16.mxu0 0
        %701 = vmatpush1.bf16.msra.mxu0 0
        %702 = vmatprep.subr.bf16.mxu0 0
        %703 = vmatpush1.bf16.msra.mxu0 0
        %704 = vmatprep.subr.bf16.mxu0 0
        %705 = vmatpush1.bf16.msra.mxu0 0
        %706 = vmatprep.subr.bf16.mxu0 0
        %707 = vmatpush1.bf16.msra.mxu0 0
        %708 = vmatprep.subr.bf16.mxu0 0
        %709 = vmatpush1.bf16.msra.mxu0 0
        %710 = vmatprep.subr.bf16.mxu0 0
        %711 = vmatpush1.bf16.msra.mxu0 0
        %712 = vmatprep.subr.bf16.mxu0 %v693
        %713 = vmatpush1.bf16.msra.mxu0 %v690
        %714 = vmatprep.subr.bf16.mxu0 0
        %715 = vmatpush2.bf16.msra.mxu0 0
        %716 = vmatprep.subr.bf16.mxu0 0
        %717 = vmatpush2.bf16.msra.mxu0 0
        %718 = vmatprep.subr.bf16.mxu0 0
        %719 = vmatpush2.bf16.msra.mxu0 0
        %720 = vmatprep.subr.bf16.mxu0 0
        %721 = vmatpush2.bf16.msra.mxu0 0
        %722 = vmatprep.subr.bf16.mxu0 0
        %723 = vmatpush2.bf16.msra.mxu0 0
        %724 = vmatprep.subr.bf16.mxu0 0
        %725 = vmatpush2.bf16.msra.mxu0 0
        %726 = vmatprep.subr.bf16.mxu0 0
        %727 = vmatpush2.bf16.msra.mxu0 0
        %728 = vmatprep.subr.bf16.mxu0 0
        %729 = vmatpush2.bf16.msra.mxu0 0
        %730 = vmatprep.mubr.bf16.mxu0 0
        %731 = vmatmul.mubr.bf16.gmra.mxu0 %v686
        %v732 = vpop.f32.mrf.mxu0
        %v733 = vadd.f32 0.0, %v732
        %v734 = vpop.f32.mrf.mxu0
        %v735 = vadd.f32 0.0, %v734
        %v736 = vpop.f32.mrf.mxu0
        %v737 = vpop.f32.mrf.mxu0
        %738 = vdwg.mxu0
        %739 = vmatprep.subr.bf16.mxu0 0
        %740 = vmatpush1.bf16.msra.mxu0 0
        %741 = vmatprep.subr.bf16.mxu0 0
        %742 = vmatpush1.bf16.msra.mxu0 0
        %743 = vmatprep.subr.bf16.mxu0 0
        %744 = vmatpush1.bf16.msra.mxu0 0
        %745 = vmatprep.subr.bf16.mxu0 0
        %746 = vmatpush1.bf16.msra.mxu0 0
        %747 = vmatprep.subr.bf16.mxu0 0
        %748 = vmatpush1.bf16.msra.mxu0 0
        %749 = vmatprep.subr.bf16.mxu0 0
        %750 = vmatpush1.bf16.msra.mxu0 0
        %751 = vmatprep.subr.bf16.mxu0 0
        %752 = vmatpush1.bf16.msra.mxu0 0
        %753 = vmatprep.subr.bf16.mxu0 0
        %754 = vmatpush1.bf16.msra.mxu0 %v696
        %755 = vmatprep.subr.bf16.mxu0 0
        %756 = vmatpush2.bf16.msra.mxu0 0
        %757 = vmatprep.subr.bf16.mxu0 0
        %758 = vmatpush2.bf16.msra.mxu0 0
        %759 = vmatprep.subr.bf16.mxu0 0
        %760 = vmatpush2.bf16.msra.mxu0 0
        %761 = vmatprep.subr.bf16.mxu0 0
        %762 = vmatpush2.bf16.msra.mxu0 0
        %763 = vmatprep.subr.bf16.mxu0 0
        %764 = vmatpush2.bf16.msra.mxu0 0
        %765 = vmatprep.subr.bf16.mxu0 0
        %766 = vmatpush2.bf16.msra.mxu0 0
        %767 = vmatprep.subr.bf16.mxu0 0
        %768 = vmatpush2.bf16.msra.mxu0 0
        %769 = vmatprep.subr.bf16.mxu0 0
        %770 = vmatpush2.bf16.msra.mxu0 0
        %771 = vmatprep.mubr.bf16.mxu0 0
        %772 = vmatmul.mubr.bf16.gmra.mxu0 %v686
        %v773 = vpop.f32.mrf.mxu0
        %v774 = vadd.f32 0.0, %v773
        %v775 = vpop.f32.mrf.mxu0
        %v776 = vpop.f32.mrf.mxu0
        %v777 = vpop.f32.mrf.mxu0
        %778 = vdwg.mxu0
        %v779 = vld [vmem:[%s337] sm:$0xff]
        %v780 = vlaneseq
        %v781 = vshrl.u32 %v780, 7
        %v782 = vsub.s32 4, %v781
        %v783 = vrot.slane %v368, %v782
        %v784 = vlaneseq
        %v785 = vshrl.u32 %v784, 7
        %v786 = vsub.s32 4, %v785
        %v787 = vrot.slane %v369, %v786
        %v788 = vlaneseq
        %v789 = vshrl.u32 %v788, 7
        %v790 = vsub.s32 4, %v789
        %v791 = vrot.slane %v370, %v790
        %793 = vset.pattern.permute.xlu0 2
        %794 = vperm.xlu0 %793, %v779
        %v795 = vpop.permute.xlu0 %794
        %vm797 = vcmp.gt.f32.partialorder %v783, %v795
        %vm798 = vcmp.gt.f32.partialorder %v787, %v795
        %vm799 = vcmp.gt.f32.partialorder %v791, %v795
        %v800 = vlaneseq
        %v801 = vshrl.u32 %v800, 7
        %v802 = vsub.s32 5, %v801
        %v803 = vrot.slane %v368, %v802
        %v804 = vlaneseq
        %v805 = vshrl.u32 %v804, 7
        %v806 = vsub.s32 5, %v805
        %v807 = vrot.slane %v369, %v806
        %v808 = vlaneseq
        %v809 = vshrl.u32 %v808, 7
        %v810 = vsub.s32 5, %v809
        %v811 = vrot.slane %v370, %v810
        %812 = vset.pattern.permute.xlu0 3
        %813 = vperm.xlu0 %812, %v779
        %v814 = vpop.permute.xlu0 %813
        %vm816 = vcmp.gt.f32.partialorder %v803, %v814
        %vm817 = vcmp.gt.f32.partialorder %v807, %v814
        %vm818 = vcmp.gt.f32.partialorder %v811, %v814
        %vm819 = vmand %vm797, %vm816
        %vm820 = vmand %vm798, %vm817
        %vm821 = vmand %vm799, %vm818
        %822 = vset.pattern.permute.xlu0 4
        %823 = vperm.xlu0 %822, %v779
        %v824 = vpop.permute.xlu0 %823
        %vm826 = vcmp.lt.f32.partialorder %v783, %v824
        %vm827 = vcmp.lt.f32.partialorder %v787, %v824
        %vm828 = vcmp.lt.f32.partialorder %v791, %v824
        %vm829 = vmand %vm819, %vm826
        %vm830 = vmand %vm820, %vm827
        %vm831 = vmand %vm821, %vm828
        %832 = vset.pattern.permute.xlu0 5
        %833 = vperm.xlu0 %832, %v779
        %v834 = vpop.permute.xlu0 %833
        %vm836 = vcmp.lt.f32.partialorder %v803, %v834
        %vm837 = vcmp.lt.f32.partialorder %v807, %v834
        %vm838 = vcmp.lt.f32.partialorder %v811, %v834
        %vm839 = vmand %vm829, %vm836
        %vm840 = vmand %vm830, %vm837
        %vm841 = vmand %vm831, %vm838
        %842 = vset.pattern.permute.xlu0 0
        %843 = vperm.xlu0 %842, %v779
        %v844 = vpop.permute.xlu0 %843
        %v846 = vsub.f32 %v783, %v844
        %v847 = vsub.f32 %v787, %v844
        %v848 = vsub.f32 %v791, %v844
        %v849 = vand.u32 2147483647, %v846
        %v850 = vand.u32 2147483647, %v847
        %v851 = vand.u32 2147483647, %v848
        %v852 = vlaneseq
        %v853 = vshrl.u32 %v852, 7
        %v854 = vsub.s32 6, %v853
        %v855 = vrot.slane %v368, %v854
        %v856 = vlaneseq
        %v857 = vshrl.u32 %v856, 7
        %v858 = vsub.s32 6, %v857
        %v859 = vrot.slane %v369, %v858
        %v860 = vlaneseq
        %v861 = vshrl.u32 %v860, 7
        %v862 = vsub.s32 6, %v861
        %v863 = vrot.slane %v370, %v862
        %vm864 = vcmp.lt.f32.partialorder %v849, %v855
        %vm865 = vcmp.lt.f32.partialorder %v850, %v859
        %vm866 = vcmp.lt.f32.partialorder %v851, %v863
        %867 = vset.pattern.permute.xlu0 1
        %868 = vperm.xlu0 %867, %v779
        %v869 = vpop.permute.xlu0 %868
        %v871 = vsub.f32 %v803, %v869
        %v872 = vsub.f32 %v807, %v869
        %v873 = vsub.f32 %v811, %v869
        %v874 = vand.u32 2147483647, %v871
        %v875 = vand.u32 2147483647, %v872
        %v876 = vand.u32 2147483647, %v873
        %vm877 = vcmp.lt.f32.partialorder %v874, %v855
        %vm878 = vcmp.lt.f32.partialorder %v875, %v859
        %vm879 = vcmp.lt.f32.partialorder %v876, %v863
        %vm880 = vmand %vm864, %vm877
        %vm881 = vmand %vm865, %vm878
        %vm882 = vmand %vm866, %vm879
        %vm883 = vmand %vm839, %vm880
        %vm884 = vmand %vm840, %vm881
        %vm885 = vmand %vm841, %vm882
        %vm886 = vmor %vm839, %vm880
        %vm887 = vmor %vm840, %vm881
        %vm888 = vmor %vm841, %vm882
        %v889 = vsel %vm886, 1, 0
        %v890 = vsel %vm887, 1, 0
        %v891 = vsel %vm888, 1, 0
        %v892 = vcvt.s32.f32 %v889
        %v893 = vcvt.s32.f32 %v890
        %v894 = vcvt.s32.f32 %v891
        %v895 = vrot.slane %v892, 4
        %v896 = vmax.f32 %v892, %v895
        %v897 = vrot.slane %v896, 2
        %v898 = vmax.f32 %v896, %v897
        %v899 = vrot.slane %v898, 1
        %v900 = vmax.f32 %v898, %v899
        %v901 = vrot.slane %v893, 4
        %v902 = vmax.f32 %v893, %v901
        %v903 = vrot.slane %v902, 2
        %v904 = vmax.f32 %v902, %v903
        %v905 = vrot.slane %v904, 1
        %v906 = vmax.f32 %v904, %v905
        %v907 = vrot.slane %v894, 4
        %v908 = vmax.f32 %v894, %v907
        %v909 = vrot.slane %v908, 2
        %v910 = vmax.f32 %v908, %v909
        %v911 = vrot.slane %v910, 1
        %v912 = vmax.f32 %v910, %v911
        %v913 = vmul.f32 %v900, %v368
        %v914 = vmul.f32 %v906, %v369
        %v915 = vmul.f32 %v912, %v370
        %v916 = vlaneseq
        %v917 = vshrl.u32 %v916, 7
        %v918 = vsub.s32 0, %v917
        %v919 = vrot.slane %v413, %v918
        %v920 = vlaneseq
        %v921 = vshrl.u32 %v920, 7
        %v922 = vsub.s32 0, %v921
        %v923 = vrot.slane %v414, %v922
        %v924 = vlaneseq
        %v925 = vshrl.u32 %v924, 7
        %v926 = vsub.s32 0, %v925
        %v927 = vrot.slane %v415, %v926
        %v928 = vmin.f32 %v919, %v824
        %v929 = vmin.f32 %v923, %v824
        %v930 = vmin.f32 %v927, %v824
        %v931 = vlaneseq
        %v932 = vshrl.u32 %v931, 7
        %v933 = vsub.s32 0, %v932
        %v934 = vrot.slane %v410, %v933
        %v935 = vlaneseq
        %v936 = vshrl.u32 %v935, 7
        %v937 = vsub.s32 0, %v936
        %v938 = vrot.slane %v411, %v937
        %v939 = vlaneseq
        %v940 = vshrl.u32 %v939, 7
        %v941 = vsub.s32 0, %v940
        %v942 = vrot.slane %v412, %v941
        %v943 = vmax.f32 %v934, %v795
        %v944 = vmax.f32 %v938, %v795
        %v945 = vmax.f32 %v942, %v795
        %v946 = vsub.f32 %v928, %v943
        %v947 = vsub.f32 %v929, %v944
        %v948 = vsub.f32 %v930, %v945
        %v949 = vmax.f32 %v946, 0.0
        %v950 = vmax.f32 %v947, 0.0
        %v951 = vmax.f32 %v948, 0.0
        %v952 = vlaneseq
        %v953 = vshrl.u32 %v952, 7
        %v954 = vsub.s32 1, %v953
        %v955 = vrot.slane %v413, %v954
        %v956 = vlaneseq
        %v957 = vshrl.u32 %v956, 7
        %v958 = vsub.s32 1, %v957
        %v959 = vrot.slane %v414, %v958
        %v960 = vlaneseq
        %v961 = vshrl.u32 %v960, 7
        %v962 = vsub.s32 1, %v961
        %v963 = vrot.slane %v415, %v962
        %v964 = vmin.f32 %v955, %v834
        %v965 = vmin.f32 %v959, %v834
        %v966 = vmin.f32 %v963, %v834
        %v967 = vlaneseq
        %v968 = vshrl.u32 %v967, 7
        %v969 = vsub.s32 1, %v968
        %v970 = vrot.slane %v410, %v969
        %v971 = vlaneseq
        %v972 = vshrl.u32 %v971, 7
        %v973 = vsub.s32 1, %v972
        %v974 = vrot.slane %v411, %v973
        %v975 = vlaneseq
        %v976 = vshrl.u32 %v975, 7
        %v977 = vsub.s32 1, %v976
        %v978 = vrot.slane %v412, %v977
        %v979 = vmax.f32 %v970, %v814
        %v980 = vmax.f32 %v974, %v814
        %v981 = vmax.f32 %v978, %v814
        %v982 = vsub.f32 %v964, %v979
        %v983 = vsub.f32 %v965, %v980
        %v984 = vsub.f32 %v966, %v981
        %v985 = vmax.f32 %v982, 0.0
        %v986 = vmax.f32 %v983, 0.0
        %v987 = vmax.f32 %v984, 0.0
        %v988 = vmul.f32 %v949, %v985
        %v989 = vmul.f32 %v950, %v986
        %v990 = vmul.f32 %v951, %v987
        %991 = vset.pattern.permute.xlu0 6
        %992 = vperm.xlu0 %991, %v779
        %v993 = vpop.permute.xlu0 %992
        %v995 = vlaneseq
        %v996 = vshrl.u32 %v995, 7
        %v997 = vsub.s32 2, %v996
        %v998 = vrot.slane %v425, %v997
        %v999 = vlaneseq
        %v1000 = vshrl.u32 %v999, 7
        %v1001 = vsub.s32 2, %v1000
        %v1002 = vrot.slane %v426, %v1001
        %v1003 = vlaneseq
        %v1004 = vshrl.u32 %v1003, 7
        %v1005 = vsub.s32 2, %v1004
        %v1006 = vrot.slane %v427, %v1005
        %v1007 = vadd.f32 %v993, %v998
        %v1008 = vadd.f32 %v993, %v1002
        %v1009 = vadd.f32 %v993, %v1006
        %v1010 = vsub.f32 %v1007, %v988
        %v1011 = vsub.f32 %v1008, %v989
        %v1012 = vsub.f32 %v1009, %v990
        %v1013 = vadd.f32 %v1010, 1e-16
        %v1014 = vadd.f32 %v1011, 1e-16
        %v1015 = vadd.f32 %v1012, 1e-16
        %v1016 = vrcp.pop %v1013
        %v1017 = vmul.f32 %v988, %v1016
        %v1018 = vrcp.pop %v1014
        %v1019 = vmul.f32 %v989, %v1018
        %v1020 = vrcp.pop %v1015
        %v1021 = vmul.f32 %v990, %v1020
        %v1022 = vsub.f32 0.0, %v733
        %v1023 = vsub.f32 0.0, %v735
        %v1024 = vsub.f32 0.0, %v774
        %v1025 = vsub.f32 %v1022, %v634
        %v1026 = vsub.f32 %v1023, %v641
        %v1027 = vsub.f32 %v1024, %v648
        %v1028 = vadd.f32 %v1017, 1e-08
        %v1029 = vadd.f32 %v1019, 1e-08
        %v1030 = vadd.f32 %v1021, 1e-08
        %v1031 = vlog2.pop %v1028
        %v1032 = vmul.f32 %v1031, 0.6931472
        %v1033 = vlog2.pop %v1029
        %v1034 = vmul.f32 %v1033, 0.6931472
        %v1035 = vlog2.pop %v1030
        %v1036 = vmul.f32 %v1035, 0.6931472
        %v1037 = vmul.f32 %v1032, 3.0
        %v1038 = vmul.f32 %v1034, 3.0
        %v1039 = vmul.f32 %v1036, 3.0
        %v1040 = vsub.f32 %v1025, %v1037
        %v1041 = vsub.f32 %v1026, %v1038
        %v1042 = vsub.f32 %v1027, %v1039
        %v1043 = vadd.f32 %v1040, 100000.0
        %v1044 = vadd.f32 %v1041, 100000.0
        %v1045 = vadd.f32 %v1042, 100000.0
        %v1046 = vsel %vm883, %v1040, %v1043
        %v1047 = vsel %vm884, %v1041, %v1044
        %v1048 = vsel %vm885, %v1042, %v1045
        %v1049 = vsub.f32 1.0, %v779
        %v1050 = vmul.f32 %v1049, 1e+09
        %1052 = vset.pattern.permute.xlu0 7
        %1053 = vperm.xlu0 %1052, %v1050
        %v1054 = vpop.permute.xlu0 %1053
        %v1056 = vadd.f32 %v1046, %v1054
        %v1057 = vadd.f32 %v1047, %v1054
        %v1058 = vadd.f32 %v1048, %v1054
        %v1059 = vsub.f32 1.0, %v913
        %v1060 = vsub.f32 1.0, %v914
        %v1061 = vsub.f32 1.0, %v915
        %v1062 = vmul.f32 %v1059, 1e+09
        %v1063 = vmul.f32 %v1060, 1e+09
        %v1064 = vmul.f32 %v1061, 1e+09
        %v1065 = vlaneseq
        %v1066 = vshrl.u32 %v1065, 7
        %v1067 = vsub.s32 3, %v1066
        %v1068 = vrot.slane %v1062, %v1067
        %v1069 = vlaneseq
        %v1070 = vshrl.u32 %v1069, 7
        %v1071 = vsub.s32 3, %v1070
        %v1072 = vrot.slane %v1063, %v1071
        %v1073 = vlaneseq
        %v1074 = vshrl.u32 %v1073, 7
        %v1075 = vsub.s32 3, %v1074
        %v1076 = vrot.slane %v1064, %v1075
        %v1077 = vadd.f32 %v1056, %v1068
        %v1078 = vadd.f32 %v1057, %v1072
        %v1079 = vadd.f32 %v1058, %v1076
        %1080 = vst [vmem:[%s319] sm:$0xff] %v1077
        %1081 = vst [vmem:[%s319 + $0x8] sm:$0xff] %v1078
        %1082 = vst [vmem:[%s319 + $0x10] sm:$0xff] %v1079
        %1083 = vset.pattern.permute.xlu0 7
        %1084 = vperm.xlu0 %1083, %v779
        %v1085 = vpop.permute.xlu0 %1084
        %v1087 = vmul.f32 %v1017, %v1085
        %v1088 = vmul.f32 %v1019, %v1085
        %v1089 = vmul.f32 %v1021, %v1085
        %v1090 = vlaneseq
        %v1091 = vshrl.u32 %v1090, 7
        %v1092 = vsub.s32 3, %v1091
        %v1093 = vrot.slane %v913, %v1092
        %v1094 = vlaneseq
        %v1095 = vshrl.u32 %v1094, 7
        %v1096 = vsub.s32 3, %v1095
        %v1097 = vrot.slane %v914, %v1096
        %v1098 = vlaneseq
        %v1099 = vshrl.u32 %v1098, 7
        %v1100 = vsub.s32 3, %v1099
        %v1101 = vrot.slane %v915, %v1100
        %v1102 = vmul.f32 %v1087, %v1093
        %v1103 = vmul.f32 %v1088, %v1097
        %v1104 = vmul.f32 %v1089, %v1101
        %1105 = vst [vmem:[%s326] sm:$0xff] %v1102
        %1106 = vst [vmem:[%s326 + $0x8] sm:$0xff] %v1103
        %1107 = vst [vmem:[%s326 + $0x10] sm:$0xff] %v1104
        %v1111 = vcombine.low %v913, %v914
        %v1113 = vunpack.c.l.s4 1966171168
        %v1114 = vunpack.c.0.s8 %v1113
        %v1115 = vlaneseq
        %v1116 = vshrl.u32 %v1115, 7
        %v1117 = vsub.s32 %v1114, %v1116
        %v1118 = vrot.slane %v1111, %v1117
        %v1120 = vunpack.c.l.s4 1966171168
        %v1121 = vunpack.c.0.s8 %v1120
        %v1122 = vlaneseq
        %v1123 = vshrl.u32 %v1122, 7
        %v1124 = vsub.s32 %v1121, %v1123
        %v1125 = vrot.slane %v915, %v1124
        %v1126 = vcombine.high %v1118, %v1125
        %v1128 = vunpack.c.l.s4 1966171168
        %v1129 = vunpack.c.0.s8 %v1128
        %v1130 = vlaneseq
        %v1131 = vshrl.u32 %v1130, 7
        %v1132 = vsub.s32 %v1129, %v1131
        %v1133 = vrot.slane %v1126, %v1132
        %v1134 = vcombine.high %v1133, %v1133
        %v1136 = vlaneseq
        %vm1137 = vcmp.ge.s32.totalorder %v1136, 0
        %vm1138 = vcmp.lt.s32.totalorder %v1136, 384
        %vm1139 = vmand %vm1137, %vm1138
        %1140 = vst.msk [vmem:[%s333] sm:$0x7] %vm1139, %v1134
        %s1141 = sand.u32 %s152, 1
        %s1142 = scalar_lea.sflag [#allocation3], %s1141
        %s1143 = sand.u32 %s152, 1
        %s1144 = smul.addr %s1143, 24
        %s1145 = scalar_lea.vmem [#allocation2], %s1144
        %s1146 = sand.u32 %s24, 1
        %s1147 = scalar_lea.sflag [#allocation5], %s1146
        %s1148 = sand.u32 %s180, 1
        %s1149 = smul.addr %s1148, 24
        %s1150 = scalar_lea.vmem [#allocation4], %s1149
        %s1151 = sand.u32 %s24, 1
        %s1152 = scalar_lea.sflag [#allocation5], %s1151
        %s1153 = sand.u32 %s208, 1
        %s1154 = smul.addr %s1153, 3
        %s1155 = scalar_lea.vmem [#allocation6], %s1154
        // Predicated region
        $region37: #{tpu_custom_call.1} parent=35 // pred_check
          %p1156 = pneg %p162
        $region38: #{tpu_custom_call.1} parent=35 // pred_check_branch
          %1158 = sbr.rel (%p1156) target = $region40
        $region39: #{tpu_custom_call.1} parent=35 // pred_region
          %s1159 = smul.u32 3, %s29
          %s1161 = ssub.s32 384, 384
          %1162 = vsyncadd %s1142, %s1161
          %s1163 = smul.addr %s28, 3
          %s1164 = sadd.s32 %s1159, %s1163
          %s1165 = smul.addr %s1164, 128
          %s1166 = scalar_lea.hbm %s4, %s1165
          %s1168 = sshll.u32 %s1145, 4
          %s1169 = int_to_ptr.vmem [resolvable:$true] %s1168
          %1171 = dma.vmem_to_hbm [thread:$0]  %s1169, 384, %s1166, %s1142
        $region40: #{tpu_custom_call.1} parent=35 // pred_fallthru
          _
        // Predicated region
        $region41: #{tpu_custom_call.1} parent=35 // pred_check
          %p1172 = pneg %p190
        $region42: #{tpu_custom_call.1} parent=35 // pred_check_branch
          %1174 = sbr.rel (%p1172) target = $region44
        $region43: #{tpu_custom_call.1} parent=35 // pred_region
          %s1175 = smul.u32 3, %s29
          %s1177 = ssub.s32 384, 384
          %1178 = vsyncadd %s1147, %s1177
          %s1179 = smul.addr %s28, 3
          %s1180 = sadd.s32 %s1175, %s1179
          %s1181 = smul.addr %s1180, 128
          %s1182 = scalar_lea.hbm %s5, %s1181
          %s1184 = sshll.u32 %s1150, 4
          %s1185 = int_to_ptr.vmem [resolvable:$true] %s1184
          %1187 = dma.vmem_to_hbm [thread:$0]  %s1185, 384, %s1182, %s1147
        $region44: #{tpu_custom_call.1} parent=35 // pred_fallthru
          _
        // Predicated region
        $region45: #{tpu_custom_call.1} parent=35 // pred_check
          %p1188 = pneg %p218
        $region46: #{tpu_custom_call.1} parent=35 // pred_check_branch
          %1190 = sbr.rel (%p1188) target = $region48
        $region47: #{tpu_custom_call.1} parent=35 // pred_region
          %s1191 = smul.u32 3, %s29
          %s1193 = ssub.s32 48, 48
          %1194 = vsyncadd %s1152, %s1193
          %s1195 = smul.addr %s28, 3
          %s1196 = sadd.s32 %s1191, %s1195
          %s1197 = smul.addr %s1196, 16
          %s1198 = scalar_lea.hbm %s6, %s1197
          %s1200 = sshll.u32 %s1155, 4
          %s1201 = int_to_ptr.vmem [resolvable:$true] %s1200
          %1203 = dma.vmem_to_hbm [thread:$0]  %s1201, 48, %s1198, %s1152
        $region48: #{tpu_custom_call.1} parent=35 // pred_fallthru
          _
      $region36: #{tpu_custom_call.1} parent=5 // pred_fallthru
        _
      %p1204 = scmp.le.s32.totalorder 2, %s19
      // Predicated region
      $region49: #{tpu_custom_call.1} parent=5 // pred_check
        %p1205 = pneg %p1204
      $region50: #{tpu_custom_call.1} parent=5 // pred_check_branch
        %1207 = sbr.rel (%p1205) target = $region52
      $region51: #{tpu_custom_call.1} parent=5 // pred_region
        %s1208 = ssub.s32 %s19, 2
        // Predicated region
        $region53: #{tpu_custom_call.1} parent=51 // pred_check
          %p1209 = pneg %p168
        $region54: #{tpu_custom_call.1} parent=51 // pred_check_branch
          %1211 = sbr.rel (%p1209) target = $region56
        $region55: #{tpu_custom_call.1} parent=51 // pred_region
          %s1212 = sand.u32 %s153, 1
          %s1213 = scalar_lea.sflag [#allocation3], %s1212
          %s1214 = sand.u32 %s153, 1
          %s1215 = smul.addr %s1214, 24
          %s1216 = scalar_lea.vmem [#allocation2], %s1215
          %1217 = dma.done %s1213, 384
        $region56: #{tpu_custom_call.1} parent=51 // pred_fallthru
          _
        // Predicated region
        $region57: #{tpu_custom_call.1} parent=51 // pred_check
          %p1218 = pneg %p196
        $region58: #{tpu_custom_call.1} parent=51 // pred_check_branch
          %1220 = sbr.rel (%p1218) target = $region60
        $region59: #{tpu_custom_call.1} parent=51 // pred_region
          %s1221 = sand.u32 %s25, 1
          %s1222 = scalar_lea.sflag [#allocation5], %s1221
          %s1223 = sand.u32 %s181, 1
          %s1224 = smul.addr %s1223, 24
          %s1225 = scalar_lea.vmem [#allocation4], %s1224
          %1226 = dma.done %s1222, 384
        $region60: #{tpu_custom_call.1} parent=51 // pred_fallthru
          _
        // Predicated region
        $region61: #{tpu_custom_call.1} parent=51 // pred_check
          %p1227 = pneg %p224
        $region62: #{tpu_custom_call.1} parent=51 // pred_check_branch
          %1229 = sbr.rel (%p1227) target = $region64
        $region63: #{tpu_custom_call.1} parent=51 // pred_region
          %s1230 = sand.u32 %s25, 1
          %s1231 = scalar_lea.sflag [#allocation5], %s1230
          %s1232 = sand.u32 %s209, 1
          %s1233 = smul.addr %s1232, 3
          %s1234 = scalar_lea.vmem [#allocation6], %s1233
          %1235 = dma.done %s1231, 48
        $region64: #{tpu_custom_call.1} parent=51 // pred_fallthru
          _
      $region52: #{tpu_custom_call.1} parent=5 // pred_fallthru
        _
    $region6: #{tpu_custom_call.1} parent=1 // loop_footer
      %s23 = sadd.s32 1, %s19
    $region7: #{tpu_custom_call.1} parent=1 // loop_footer_branch
      %18 = sbr.rel target = $region3
    $region8: #{tpu_custom_call.1} parent=1 // loop_exit
      _
    %1236 = vsyncpa [#allocation3], 1
    %s1237 = scalar_lea.sflag [#allocation3], 1
    %1238 = vsyncpa %s1237, 1
    %1239 = vsyncpa [#allocation5], 1
    %s1240 = scalar_lea.sflag [#allocation5], 1
    %1241 = vsyncpa %s1240, 1

</llo_original>
